<compile_context>
chip_gen: v7x
topology: tpu7x:2x2x1
jax: 0.10.0
libtpu: 0.0.40
codegen_flags: <defaults>
</compile_context>

<pallas_src>
import jax
import jax.numpy as jnp
from jax.experimental import pallas as pl
from jax.experimental.pallas import tpu as pltpu

LANE = 128                       # every matmul output (and K) dim padded to this
VMEM_BUDGET = 28 * 1024 * 1024   # stay under v7x's 32 MiB default scoped VMEM


def _round_up(n, m):
    return ((n + m - 1) // m) * m


def _pick_tb(B):
    # Small batch: one grid step (tb == B). The block then equals the full array
    # dim, so the (8,128)/(16,128) tiling rule is trivially satisfied and there is
    # no duplicated weight DMA across v7x TensorCores and no per-step overhead.
    if B <= 256:
        return B
    # Large batch: prefer tb >= 256 to fill the 256x256 MXU on v6e/v7x.
    for cand in (512, 256):
        if B % cand == 0:
            return cand
    for cand in (128, 64, 32, 16):
        if B % cand == 0:
            return cand
    return B  # odd batch: single full-array step


def _vmem_estimate(tb, Fp, H1p, H2p, Cp, out_bytes, weight_bufs, x_bufs):
    weights = (Fp * H1p + H1p * H2p + H2p * Cp) * 2 + (H1p + H2p + Cp) * 4
    x_buf = tb * Fp * 2
    out_buf = tb * Cp * out_bytes
    inter = tb * (H1p + H2p + Cp) * 4 + tb * (H1p + H2p) * 2
    return weights * weight_bufs + x_buf * x_bufs + out_buf * 2 + inter


def mlp_kernel(x_ref, w1_ref, b1_ref, w2_ref, b2_ref, w3_ref, b3_ref, o_ref):
    # Entire hot path fused in VMEM: 3 MXU matmuls (bf16 operands, f32 accumulation)
    # with bias-add + ReLU on the VPU in f32.
    x = x_ref[...]                                                               # (tb, Fp)  bf16
    h1 = jnp.dot(x, w1_ref[...], preferred_element_type=jnp.float32) + b1_ref[...]
    h1 = jnp.maximum(h1, 0.0).astype(jnp.bfloat16)                               # (tb, H1p) bf16
    h2 = jnp.dot(h1, w2_ref[...], preferred_element_type=jnp.float32) + b2_ref[...]
    h2 = jnp.maximum(h2, 0.0).astype(jnp.bfloat16)                               # (tb, H2p) bf16
    logits = jnp.dot(h2, w3_ref[...], preferred_element_type=jnp.float32) + b3_ref[...]
    o_ref[...] = logits.astype(o_ref.dtype)                                      # (tb, Cp) lane-dense store


def mlp_forward(x, w1, b1, w2, b2, w3, b3, *, tb=None,
                out_dtype=jnp.float32, return_padded=False, x_buffer_count=2):
    """logits = relu(relu(x@w1+b1)@w2+b2)@w3+b3.

    Weights are stored (in_dim, out_dim), i.e. transposed vs. nn.Linear's (out, in),
    so x @ W + b == F.linear(x, W_pt, b).
    """
    B, F = x.shape
    H1, H2, C = w1.shape[1], w2.shape[1], w3.shape[1]
    Fp, H1p, H2p, Cp = (_round_up(d, LANE) for d in (F, H1, H2, C))

    # Zero-pad every matmul dim (including the contraction dim F) to a lane multiple.
    # Padded x columns / weight rows / bias entries are zero, so logits[:, :C] is exact
    # up to bf16 rounding of the operands.
    xb = jnp.pad(x, ((0, 0), (0, Fp - F))).astype(jnp.bfloat16)
    w1p = jnp.pad(w1, ((0, Fp - F), (0, H1p - H1))).astype(jnp.bfloat16)
    b1p = jnp.pad(b1, ((0, 0), (0, H1p - H1)))
    w2p = jnp.pad(w2, ((0, H1p - H1), (0, H2p - H2))).astype(jnp.bfloat16)
    b2p = jnp.pad(b2, ((0, 0), (0, H2p - H2)))
    w3p = jnp.pad(w3, ((0, H2p - H2), (0, Cp - C))).astype(jnp.bfloat16)
    b3p = jnp.pad(b3, ((0, 0), (0, Cp - C)))

    if tb is None:
        tb = _pick_tb(B)
    assert B % tb == 0, "batch must be divisible by the batch tile"
    assert tb == B or tb % 16 == 0, "partial batch tiles must be a multiple of 16 (bf16 sublanes)"

    out_bytes = jnp.dtype(out_dtype).itemsize

    # v7x-aware VMEM budget: shrink tb first, then raise the scoped limit if needed.
    est = _vmem_estimate(tb, Fp, H1p, H2p, Cp, out_bytes, 1, x_buffer_count)
    while est > VMEM_BUDGET and tb % 32 == 0:
        tb //= 2
        est = _vmem_estimate(tb, Fp, H1p, H2p, Cp, out_bytes, 1, x_buffer_count)
    vmem_limit = min(64 * 1024 * 1024, int(est * 1.2)) if est > VMEM_BUDGET else None

    grid = (B // tb,)

    flops = 2 * B * (Fp * H1p + H1p * H2p + H2p * Cp)
    bytes_accessed = (B * Fp * 2
                      + (Fp * H1p + H1p * H2p + H2p * Cp) * 2
                      + (H1p + H2p + Cp) * 4
                      + B * Cp * out_bytes)
    cost = pl.CostEstimate(flops=flops, transcendentals=0, bytes_accessed=bytes_accessed)

    cp_kwargs = dict(dimension_semantics=("parallel",))  # batch tiles independent (megacore)
    if vmem_limit is not None:
        cp_kwargs["vmem_limit_bytes"] = vmem_limit
    compiler_params = pltpu.CompilerParams(**cp_kwargs)

    def build_call(single_buffer_weights):
        # Constant-index weight/bias blocks: single-buffered (their block index never
        # changes, so double-buffering only doubles the resident VMEM footprint).
        if single_buffer_weights:
            const = lambda shape: pl.BlockSpec(shape, lambda i: (0, 0),
                                               pipeline_mode=pl.Buffered(1))
        else:
            const = lambda shape: pl.BlockSpec(shape, lambda i: (0, 0))
        x_kwargs = {}
        if x_buffer_count != 2:
            x_kwargs["pipeline_mode"] = pl.Buffered(x_buffer_count)
        return pl.pallas_call(
            mlp_kernel,
            out_shape=jax.ShapeDtypeStruct((B, Cp), out_dtype),
            grid_spec=pltpu.PrefetchScalarGridSpec(
                num_scalar_prefetch=0,
                grid=grid,
                in_specs=[
                    pl.BlockSpec((tb, Fp), lambda i: (i, 0), **x_kwargs),  # x tiled over batch
                    const((Fp, H1p)), const((1, H1p)),
                    const((H1p, H2p)), const((1, H2p)),
                    const((H2p, Cp)), const((1, Cp)),
                ],
                out_specs=pl.BlockSpec((tb, Cp), lambda i: (i, 0)),
            ),
            compiler_params=compiler_params,
            cost_estimate=cost,
        )

    args = (xb, w1p, b1p, w2p, b2p, w3p, b3p)
    try:
        out_padded = build_call(True)(*args)
    except Exception:
        # Fallback for JAX versions where pipeline_mode=Buffered(1) is unsupported.
        out_padded = build_call(False)(*args)

    if return_padded:
        return out_padded          # consumer can slice [:, :C] later (saves an HBM pass)
    return out_padded[:, :C]


def init_params(key, feat_dim, hidden_dim1, hidden_dim2, n_classes):
    # Deterministic PyTorch-style uniform fan-in init, stored as (in, out) in f32.
    ks = jax.random.split(key, 6)

    def linear(kw, kb, fan_in, fan_out):
        bound = 1.0 / jnp.sqrt(jnp.float32(fan_in))
        w = jax.random.uniform(kw, (fan_in, fan_out), jnp.float32, -bound, bound)
        b = jax.random.uniform(kb, (1, fan_out), jnp.float32, -bound, bound)
        return w, b

    w1, b1 = linear(ks[0], ks[1], feat_dim, hidden_dim1)
    w2, b2 = linear(ks[2], ks[3], hidden_dim1, hidden_dim2)
    w3, b3 = linear(ks[4], ks[5], hidden_dim2, n_classes)
    return w1, b1, w2, b2, w3, b3


if __name__ == "__main__":
    # Module-default shapes: x is (batch, feat_dim).
    batch = 32
    feat_dim = 768
    hidden_dim1 = 256
    hidden_dim2 = 64
    n_classes = 4

    key = jax.random.PRNGKey(0)
    kx, kp = jax.random.split(key)
    x = jax.random.normal(kx, (batch, feat_dim), jnp.float32)
    w1, b1, w2, b2, w3, b3 = init_params(kp, feat_dim, hidden_dim1, hidden_dim2, n_classes)

    logits = mlp_forward(x, w1, b1, w2, b2, w3, b3)
    logits = jax.block_until_ready(logits)
    assert logits.shape == (batch, n_classes)

    # Reference mirroring the kernel's numerics (bf16 operands, f32 accumulation).
    _bf = lambda v: v.astype(jnp.bfloat16).astype(jnp.float32)
    h1 = jnp.maximum(_bf(x) @ _bf(w1) + b1, 0.0)
    h2 = jnp.maximum(_bf(h1) @ _bf(w2) + b2, 0.0)
    ref_bf16 = _bf(h2) @ _bf(w3) + b3
    assert jnp.allclose(logits, ref_bf16, atol=1e-2, rtol=1e-2)

    # Sanity check against the pure-f32 PyTorch-equivalent forward (looser tolerance
    # since operands were rounded to bf16).
    h1f = jnp.maximum(x @ w1 + b1, 0.0)
    h2f = jnp.maximum(h1f @ w2 + b2, 0.0)
    ref_f32 = h2f @ w3 + b3
    assert jnp.allclose(logits, ref_f32, atol=1e-1, rtol=1e-1)

    print("KERNEL_OK")
</pallas_src>

<mosaic_0001>
module attributes {stable_mosaic.version = 11 : i64} {
  func.func @mlp_kernel(%arg0: i32, %arg1: memref<32x768xbf16, #tpu.memory_space<vmem>>, %arg2: memref<768x256xbf16, #tpu.memory_space<vmem>>, %arg3: memref<1x256xf32, #tpu.memory_space<vmem>>, %arg4: memref<256x128xbf16, #tpu.memory_space<vmem>>, %arg5: memref<1x128xf32, #tpu.memory_space<vmem>>, %arg6: memref<128x128xbf16, #tpu.memory_space<vmem>>, %arg7: memref<1x128xf32, #tpu.memory_space<vmem>>, %arg8: memref<32x128xf32, #tpu.memory_space<vmem>>) attributes {dimension_semantics = [#tpu.dimension_semantics<parallel>], iteration_bounds = array<i64: 1>, scalar_prefetch = 0 : i64, scratch_operands = 0 : i64, tpu.core_type = #tpu.core_type<tc>, window_params = [{transform_indices = @transform_0, window_bounds = array<i64: 32, 768>}, {pipeline_mode = #tpu.pipeline_mode<synchronous>, transform_indices = @transform_1, window_bounds = array<i64: 768, 256>}, {pipeline_mode = #tpu.pipeline_mode<synchronous>, transform_indices = @transform_2, window_bounds = array<i64: 1, 256>}, {pipeline_mode = #tpu.pipeline_mode<synchronous>, transform_indices = @transform_3, window_bounds = array<i64: 256, 128>}, {pipeline_mode = #tpu.pipeline_mode<synchronous>, transform_indices = @transform_4, window_bounds = array<i64: 1, 128>}, {pipeline_mode = #tpu.pipeline_mode<synchronous>, transform_indices = @transform_5, window_bounds = array<i64: 128, 128>}, {pipeline_mode = #tpu.pipeline_mode<synchronous>, transform_indices = @transform_6, window_bounds = array<i64: 1, 128>}, {transform_indices = @transform_7, window_bounds = array<i64: 32, 128>}]} {
    %c0 = arith.constant 0 : index
    %c0_0 = arith.constant 0 : index
    %0 = vector.load %arg1[%c0, %c0_0] : memref<32x768xbf16, #tpu.memory_space<vmem>>, vector<32x768xbf16>
    %c0_1 = arith.constant 0 : index
    %c0_2 = arith.constant 0 : index
    %1 = vector.load %arg2[%c0_1, %c0_2] : memref<768x256xbf16, #tpu.memory_space<vmem>>, vector<768x256xbf16>
    %cst = arith.constant dense<0.000000e+00> : vector<32x256xf32>
    %2 = tpu.matmul %0, %1, %cst {dimension_numbers = #tpu.dot_dimension_numbers<[1], [0], [0], [1], [0, 0, 1, 1], [], []>} : vector<32x768xbf16>, vector<768x256xbf16>, vector<32x256xf32> -> vector<32x256xf32>
    %c0_3 = arith.constant 0 : index
    %c0_4 = arith.constant 0 : index
    %3 = vector.load %arg3[%c0_3, %c0_4] : memref<1x256xf32, #tpu.memory_space<vmem>>, vector<1x256xf32>
    %4 = vector.broadcast %3 : vector<1x256xf32> to vector<32x256xf32>
    %5 = arith.addf %2, %4 : vector<32x256xf32>
    %cst_5 = arith.constant 0.000000e+00 : f32
    %6 = vector.broadcast %cst_5 : f32 to vector<32x256xf32>
    %7 = arith.maximumf %5, %6 : vector<32x256xf32>
    %8 = arith.truncf %7 : vector<32x256xf32> to vector<32x256xbf16>
    %c0_6 = arith.constant 0 : index
    %c0_7 = arith.constant 0 : index
    %9 = vector.load %arg4[%c0_6, %c0_7] : memref<256x128xbf16, #tpu.memory_space<vmem>>, vector<256x128xbf16>
    %cst_8 = arith.constant dense<0.000000e+00> : vector<32x128xf32>
    %10 = tpu.matmul %8, %9, %cst_8 {dimension_numbers = #tpu.dot_dimension_numbers<[1], [0], [0], [1], [0, 0, 1, 1], [], []>} : vector<32x256xbf16>, vector<256x128xbf16>, vector<32x128xf32> -> vector<32x128xf32>
    %c0_9 = arith.constant 0 : index
    %c0_10 = arith.constant 0 : index
    %11 = vector.load %arg5[%c0_9, %c0_10] : memref<1x128xf32, #tpu.memory_space<vmem>>, vector<1x128xf32>
    %12 = vector.broadcast %11 : vector<1x128xf32> to vector<32x128xf32>
    %13 = arith.addf %10, %12 : vector<32x128xf32>
    %cst_11 = arith.constant 0.000000e+00 : f32
    %14 = vector.broadcast %cst_11 : f32 to vector<32x128xf32>
    %15 = arith.maximumf %13, %14 : vector<32x128xf32>
    %16 = arith.truncf %15 : vector<32x128xf32> to vector<32x128xbf16>
    %c0_12 = arith.constant 0 : index
    %c0_13 = arith.constant 0 : index
    %17 = vector.load %arg6[%c0_12, %c0_13] : memref<128x128xbf16, #tpu.memory_space<vmem>>, vector<128x128xbf16>
    %cst_14 = arith.constant dense<0.000000e+00> : vector<32x128xf32>
    %18 = tpu.matmul %16, %17, %cst_14 {dimension_numbers = #tpu.dot_dimension_numbers<[1], [0], [0], [1], [0, 0, 1, 1], [], []>} : vector<32x128xbf16>, vector<128x128xbf16>, vector<32x128xf32> -> vector<32x128xf32>
    %c0_15 = arith.constant 0 : index
    %c0_16 = arith.constant 0 : index
    %19 = vector.load %arg7[%c0_15, %c0_16] : memref<1x128xf32, #tpu.memory_space<vmem>>, vector<1x128xf32>
    %20 = vector.broadcast %19 : vector<1x128xf32> to vector<32x128xf32>
    %21 = arith.addf %18, %20 : vector<32x128xf32>
    %c0_17 = arith.constant 0 : index
    %c0_18 = arith.constant 0 : index
    %22 = vector.load %arg8[%c0_17, %c0_18] : memref<32x128xf32, #tpu.memory_space<vmem>>, vector<32x128xf32>
    tpu.vector_store %arg8[%c0_17, %c0_18], %21 {strides = array<i32>} : memref<32x128xf32, #tpu.memory_space<vmem>>, vector<32x128xf32>,
    return
  }
  func.func @transform_0(%arg0: i32) -> (i32, i32) {
    %c0_i32 = arith.constant 0 : i32
    %c0_i32_0 = arith.constant 0 : i32
    return %arg0, %c0_i32 : i32, i32
  }
  func.func @transform_1(%arg0: i32) -> (i32, i32) {
    %c0_i32 = arith.constant 0 : i32
    %c0_i32_0 = arith.constant 0 : i32
    %c0_i32_1 = arith.constant 0 : i32
    return %c0_i32, %c0_i32_0 : i32, i32
  }
  func.func @transform_2(%arg0: i32) -> (i32, i32) {
    %c0_i32 = arith.constant 0 : i32
    %c0_i32_0 = arith.constant 0 : i32
    %c0_i32_1 = arith.constant 0 : i32
    return %c0_i32, %c0_i32_0 : i32, i32
  }
  func.func @transform_3(%arg0: i32) -> (i32, i32) {
    %c0_i32 = arith.constant 0 : i32
    %c0_i32_0 = arith.constant 0 : i32
    %c0_i32_1 = arith.constant 0 : i32
    return %c0_i32, %c0_i32_0 : i32, i32
  }
  func.func @transform_4(%arg0: i32) -> (i32, i32) {
    %c0_i32 = arith.constant 0 : i32
    %c0_i32_0 = arith.constant 0 : i32
    %c0_i32_1 = arith.constant 0 : i32
    return %c0_i32, %c0_i32_0 : i32, i32
  }
  func.func @transform_5(%arg0: i32) -> (i32, i32) {
    %c0_i32 = arith.constant 0 : i32
    %c0_i32_0 = arith.constant 0 : i32
    %c0_i32_1 = arith.constant 0 : i32
    return %c0_i32, %c0_i32_0 : i32, i32
  }
  func.func @transform_6(%arg0: i32) -> (i32, i32) {
    %c0_i32 = arith.constant 0 : i32
    %c0_i32_0 = arith.constant 0 : i32
    %c0_i32_1 = arith.constant 0 : i32
    return %c0_i32, %c0_i32_0 : i32, i32
  }
  func.func @transform_7(%arg0: i32) -> (i32, i32) {
    %c0_i32 = arith.constant 0 : i32
    %c0_i32_0 = arith.constant 0 : i32
    return %arg0, %c0_i32 : i32, i32
  }
}

module attributes {stable_mosaic.version = 11 : i64} {
  func.func @mlp_kernel(%arg0: i32, %arg1: memref<32x768xbf16, #tpu.memory_space<vmem>>, %arg2: memref<768x256xbf16, #tpu.memory_space<vmem>>, %arg3: memref<1x256xf32, #tpu.memory_space<vmem>>, %arg4: memref<256x128xbf16, #tpu.memory_space<vmem>>, %arg5: memref<1x128xf32, #tpu.memory_space<vmem>>, %arg6: memref<128x128xbf16, #tpu.memory_space<vmem>>, %arg7: memref<1x128xf32, #tpu.memory_space<vmem>>, %arg8: memref<32x128xf32, #tpu.memory_space<vmem>>) attributes {dimension_semantics = [#tpu.dimension_semantics<parallel>], iteration_bounds = array<i64: 1>, scalar_prefetch = 0 : i64, scratch_operands = 0 : i64, tpu.core_type = #tpu.core_type<tc>, window_params = [{transform_indices = @transform_0, window_bounds = array<i64: 32, 768>}, {pipeline_mode = #tpu.pipeline_mode<synchronous>, transform_indices = @transform_1, window_bounds = array<i64: 768, 256>}, {pipeline_mode = #tpu.pipeline_mode<synchronous>, transform_indices = @transform_2, window_bounds = array<i64: 1, 256>}, {pipeline_mode = #tpu.pipeline_mode<synchronous>, transform_indices = @transform_3, window_bounds = array<i64: 256, 128>}, {pipeline_mode = #tpu.pipeline_mode<synchronous>, transform_indices = @transform_4, window_bounds = array<i64: 1, 128>}, {pipeline_mode = #tpu.pipeline_mode<synchronous>, transform_indices = @transform_5, window_bounds = array<i64: 128, 128>}, {pipeline_mode = #tpu.pipeline_mode<synchronous>, transform_indices = @transform_6, window_bounds = array<i64: 1, 128>}, {transform_indices = @transform_7, window_bounds = array<i64: 32, 128>}]} {
    %c0 = arith.constant 0 : index
    %c0_0 = arith.constant 0 : index
    %0 = vector.load %arg1[%c0, %c0_0] : memref<32x768xbf16, #tpu.memory_space<vmem>>, vector<32x768xbf16>
    %c0_1 = arith.constant 0 : index
    %c0_2 = arith.constant 0 : index
    %1 = vector.load %arg2[%c0_1, %c0_2] : memref<768x256xbf16, #tpu.memory_space<vmem>>, vector<768x256xbf16>
    %cst = arith.constant dense<0.000000e+00> : vector<32x256xf32>
    %2 = tpu.matmul %0, %1, %cst {dimension_numbers = #tpu.dot_dimension_numbers<[1], [0], [0], [1], [0, 0, 1, 1], [], []>} : vector<32x768xbf16>, vector<768x256xbf16>, vector<32x256xf32> -> vector<32x256xf32>
    %c0_3 = arith.constant 0 : index
    %c0_4 = arith.constant 0 : index
    %3 = vector.load %arg3[%c0_3, %c0_4] : memref<1x256xf32, #tpu.memory_space<vmem>>, vector<1x256xf32>
    %4 = vector.broadcast %3 : vector<1x256xf32> to vector<32x256xf32>
    %5 = arith.addf %2, %4 : vector<32x256xf32>
    %cst_5 = arith.constant 0.000000e+00 : f32
    %6 = vector.broadcast %cst_5 : f32 to vector<32x256xf32>
    %7 = arith.maximumf %5, %6 : vector<32x256xf32>
    %8 = arith.truncf %7 : vector<32x256xf32> to vector<32x256xbf16>
    %c0_6 = arith.constant 0 : index
    %c0_7 = arith.constant 0 : index
    %9 = vector.load %arg4[%c0_6, %c0_7] : memref<256x128xbf16, #tpu.memory_space<vmem>>, vector<256x128xbf16>
    %cst_8 = arith.constant dense<0.000000e+00> : vector<32x128xf32>
    %10 = tpu.matmul %8, %9, %cst_8 {dimension_numbers = #tpu.dot_dimension_numbers<[1], [0], [0], [1], [0, 0, 1, 1], [], []>} : vector<32x256xbf16>, vector<256x128xbf16>, vector<32x128xf32> -> vector<32x128xf32>
    %c0_9 = arith.constant 0 : index
    %c0_10 = arith.constant 0 : index
    %11 = vector.load %arg5[%c0_9, %c0_10] : memref<1x128xf32, #tpu.memory_space<vmem>>, vector<1x128xf32>
    %12 = vector.broadcast %11 : vector<1x128xf32> to vector<32x128xf32>
    %13 = arith.addf %10, %12 : vector<32x128xf32>
    %cst_11 = arith.constant 0.000000e+00 : f32
    %14 = vector.broadcast %cst_11 : f32 to vector<32x128xf32>
    %15 = arith.maximumf %13, %14 : vector<32x128xf32>
    %16 = arith.truncf %15 : vector<32x128xf32> to vector<32x128xbf16>
    %c0_12 = arith.constant 0 : index
    %c0_13 = arith.constant 0 : index
    %17 = vector.load %arg6[%c0_12, %c0_13] : memref<128x128xbf16, #tpu.memory_space<vmem>>, vector<128x128xbf16>
    %cst_14 = arith.constant dense<0.000000e+00> : vector<32x128xf32>
    %18 = tpu.matmul %16, %17, %cst_14 {dimension_numbers = #tpu.dot_dimension_numbers<[1], [0], [0], [1], [0, 0, 1, 1], [], []>} : vector<32x128xbf16>, vector<128x128xbf16>, vector<32x128xf32> -> vector<32x128xf32>
    %c0_15 = arith.constant 0 : index
    %c0_16 = arith.constant 0 : index
    %19 = vector.load %arg7[%c0_15, %c0_16] : memref<1x128xf32, #tpu.memory_space<vmem>>, vector<1x128xf32>
    %20 = vector.broadcast %19 : vector<1x128xf32> to vector<32x128xf32>
    %21 = arith.addf %18, %20 : vector<32x128xf32>
    %c0_17 = arith.constant 0 : index
    %c0_18 = arith.constant 0 : index
    %22 = vector.load %arg8[%c0_17, %c0_18] : memref<32x128xf32, #tpu.memory_space<vmem>>, vector<32x128xf32>
    tpu.vector_store %arg8[%c0_17, %c0_18], %21 {strides = array<i32>} : memref<32x128xf32, #tpu.memory_space<vmem>>, vector<32x128xf32>,
    return
  }
  func.func @transform_0(%arg0: i32) -> (i32, i32) {
    %c0_i32 = arith.constant 0 : i32
    %c0_i32_0 = arith.constant 0 : i32
    return %arg0, %c0_i32 : i32, i32
  }
  func.func @transform_1(%arg0: i32) -> (i32, i32) {
    %c0_i32 = arith.constant 0 : i32
    %c0_i32_0 = arith.constant 0 : i32
    %c0_i32_1 = arith.constant 0 : i32
    return %c0_i32, %c0_i32_0 : i32, i32
  }
  func.func @transform_2(%arg0: i32) -> (i32, i32) {
    %c0_i32 = arith.constant 0 : i32
    %c0_i32_0 = arith.constant 0 : i32
    %c0_i32_1 = arith.constant 0 : i32
    return %c0_i32, %c0_i32_0 : i32, i32
  }
  func.func @transform_3(%arg0: i32) -> (i32, i32) {
    %c0_i32 = arith.constant 0 : i32
    %c0_i32_0 = arith.constant 0 : i32
    %c0_i32_1 = arith.constant 0 : i32
    return %c0_i32, %c0_i32_0 : i32, i32
  }
  func.func @transform_4(%arg0: i32) -> (i32, i32) {
    %c0_i32 = arith.constant 0 : i32
    %c0_i32_0 = arith.constant 0 : i32
    %c0_i32_1 = arith.constant 0 : i32
    return %c0_i32, %c0_i32_0 : i32, i32
  }
  func.func @transform_5(%arg0: i32) -> (i32, i32) {
    %c0_i32 = arith.constant 0 : i32
    %c0_i32_0 = arith.constant 0 : i32
    %c0_i32_1 = arith.constant 0 : i32
    return %c0_i32, %c0_i32_0 : i32, i32
  }
  func.func @transform_6(%arg0: i32) -> (i32, i32) {
    %c0_i32 = arith.constant 0 : i32
    %c0_i32_0 = arith.constant 0 : i32
    %c0_i32_1 = arith.constant 0 : i32
    return %c0_i32, %c0_i32_0 : i32, i32
  }
  func.func @transform_7(%arg0: i32) -> (i32, i32) {
    %c0_i32 = arith.constant 0 : i32
    %c0_i32_0 = arith.constant 0 : i32
    return %arg0, %c0_i32 : i32, i32
  }
}

</mosaic_0001>

<llo_original>
// kernel: tpu_custom_call.1
$region0: #{tpu_custom_call.1}
  #allocation0 [shape = 'u32[]', space=smem, size = 0x4, offset = 0x4, fixed_abs, tag = 'smem constant byte address 0x4 - core index']
  #allocation1 [shape = 'u32[144,128]{1,0:T(1,128)}', space=vmem, size = 0x12000, scoped, tag = 'internal scratch']
  %s0 = inlined_call_operand.hbm [shape: bf16[32,768], index: 0, kind: input, shape index: {}]
  %s1 = inlined_call_operand.hbm [shape: bf16[768,256], index: 1, kind: input, shape index: {}]
  %s2 = inlined_call_operand.vmem [shape: f32[1,256], index: 2, kind: input, shape index: {}]
  %s3 = inlined_call_operand.hbm [shape: bf16[256,128], index: 3, kind: input, shape index: {}]
  %s4 = inlined_call_operand.vmem [shape: f32[1,128], index: 4, kind: input, shape index: {}]
  %s5 = inlined_call_operand.hbm [shape: bf16[128,128], index: 5, kind: input, shape index: {}]
  %s6 = inlined_call_operand.vmem [shape: f32[1,128], index: 6, kind: input, shape index: {}]
  %s7 = inlined_call_operand.hbm [shape: f32[32,128], index: 7, kind: output, shape index: {}]
  %s8 = sld [smem:[#allocation0]]
  $region54: #{tpu_custom_call.1} parent=0
    _
  %s10 = ssub.s32 1, %s8
  %s11 = scalar_select 0, %s10, %s8
  $region1: #{tpu_custom_call.1} parent=0
    #allocation2 [shape = 'u8[49152]{0}', space=vmem, size = 0xc000, scoped, tag = 'input window, operand 0, single buffered']
    #allocation3 [shape = 's32[1]{0}', space=sflag, size = 0x4, scoped, tag = 'scoped memory for tpu_custom_call.1']
    #allocation4 [shape = 's32[1]{0}', space=sflag, size = 0x4, scoped, tag = 'scoped memory for tpu_custom_call.1']
    #allocation5 [shape = 'u8[393216]{0}', space=vmem, size = 0x60000, scoped, tag = 'input window, operand 1, single buffered']
    #allocation6 [shape = 's32[1]{0}', space=sflag, size = 0x4, scoped, tag = 'scoped memory for tpu_custom_call.1']
    #allocation7 [shape = 'u8[65536]{0}', space=vmem, size = 0x10000, scoped, tag = 'input window, operand 3, single buffered']
    #allocation8 [shape = 'u8[32768]{0}', space=vmem, size = 0x8000, scoped, tag = 'input window, operand 5, single buffered']
    #allocation9 [shape = 's32[1]{0}', space=sflag, size = 0x4, scoped, tag = 'scoped memory for tpu_custom_call.1']
    #allocation10 [shape = 'u8[16384]{0}', space=vmem, size = 0x4000, scoped, tag = 'output window, operand 0, single buffered']
    %12 = vsyncpa [#allocation3], 0
    %13 = vsyncpa [#allocation6], 0
    %14 = vsyncpa [#allocation9], 0
    %15 = vsyncpa [#allocation4], 0
    // Predicated region
    $region2: #{tpu_custom_call.1} parent=1 // pred_check
      _
    $region3: #{tpu_custom_call.1} parent=1 // pred_check_branch
      %17 = sbr.rel (0) target = $region5
    $region4: #{tpu_custom_call.1} parent=1 // pred_region
      %s19 = ssub.s32 1536, 1536
      %20 = vsyncadd [#allocation3], %s19
      %s21 = sshll.u32 [#allocation2], 4
      %s22 = int_to_ptr.vmem [resolvable:$true] %s21
      %27 = dma.hbm_to_vmem [thread:$0]  %s0, 1536, %s22, [#allocation3], 384, 384, 24
    $region5: #{tpu_custom_call.1} parent=1 // pred_fallthru
      _
    // Predicated region
    $region6: #{tpu_custom_call.1} parent=1 // pred_check
      _
    $region7: #{tpu_custom_call.1} parent=1 // pred_check_branch
      %29 = sbr.rel (0) target = $region9
    $region8: #{tpu_custom_call.1} parent=1 // pred_region
      %s31 = ssub.s32 12288, 12288
      %32 = vsyncadd [#allocation6], %s31
      %s33 = sshll.u32 [#allocation5], 4
      %s34 = int_to_ptr.vmem [resolvable:$true] %s33
      %39 = dma.hbm_to_vmem [thread:$0]  %s1, 12288, %s34, [#allocation6], 128, 128, 8
    $region9: #{tpu_custom_call.1} parent=1 // pred_fallthru
      _
    // Predicated region
    $region10: #{tpu_custom_call.1} parent=1 // pred_check
      _
    $region11: #{tpu_custom_call.1} parent=1 // pred_check_branch
      %41 = sbr.rel (0) target = $region13
    $region12: #{tpu_custom_call.1} parent=1 // pred_region
      _
    $region13: #{tpu_custom_call.1} parent=1 // pred_fallthru
      _
    // Predicated region
    $region14: #{tpu_custom_call.1} parent=1 // pred_check
      _
    $region15: #{tpu_custom_call.1} parent=1 // pred_check_branch
      %43 = sbr.rel (0) target = $region17
    $region16: #{tpu_custom_call.1} parent=1 // pred_region
      %s45 = ssub.s32 2048, 2048
      %46 = vsyncadd [#allocation6], %s45
      %s47 = sshll.u32 [#allocation7], 4
      %s48 = int_to_ptr.vmem [resolvable:$true] %s47
      %53 = dma.hbm_to_vmem [thread:$0]  %s3, 2048, %s48, [#allocation6], 64, 64, 4
    $region17: #{tpu_custom_call.1} parent=1 // pred_fallthru
      _
    // Predicated region
    $region18: #{tpu_custom_call.1} parent=1 // pred_check
      _
    $region19: #{tpu_custom_call.1} parent=1 // pred_check_branch
      %55 = sbr.rel (0) target = $region21
    $region20: #{tpu_custom_call.1} parent=1 // pred_region
      _
    $region21: #{tpu_custom_call.1} parent=1 // pred_fallthru
      _
    // Predicated region
    $region22: #{tpu_custom_call.1} parent=1 // pred_check
      _
    $region23: #{tpu_custom_call.1} parent=1 // pred_check_branch
      %57 = sbr.rel (0) target = $region25
    $region24: #{tpu_custom_call.1} parent=1 // pred_region
      %s59 = ssub.s32 1024, 1024
      %60 = vsyncadd [#allocation9], %s59
      %s61 = sshll.u32 [#allocation8], 4
      %s62 = int_to_ptr.vmem [resolvable:$true] %s61
      %67 = dma.hbm_to_vmem [thread:$0]  %s5, 1024, %s62, [#allocation9], 64, 64, 4
    $region25: #{tpu_custom_call.1} parent=1 // pred_fallthru
      _
    // Predicated region
    $region26: #{tpu_custom_call.1} parent=1 // pred_check
      _
    $region27: #{tpu_custom_call.1} parent=1 // pred_check_branch
      %69 = sbr.rel (0) target = $region29
    $region28: #{tpu_custom_call.1} parent=1 // pred_region
      _
    $region29: #{tpu_custom_call.1} parent=1 // pred_fallthru
      _
    // Predicated region
    $region30: #{tpu_custom_call.1} parent=1 // pred_check
      _
    $region31: #{tpu_custom_call.1} parent=1 // pred_check_branch
      %71 = sbr.rel (0) target = $region33
    $region32: #{tpu_custom_call.1} parent=1 // pred_region
      %72 = dma.done [#allocation3], 1536
    $region33: #{tpu_custom_call.1} parent=1 // pred_fallthru
      _
    // Predicated region
    $region34: #{tpu_custom_call.1} parent=1 // pred_check
      _
    $region35: #{tpu_custom_call.1} parent=1 // pred_check_branch
      %74 = sbr.rel (0) target = $region37
    $region36: #{tpu_custom_call.1} parent=1 // pred_region
      %75 = dma.done [#allocation6], 12288
    $region37: #{tpu_custom_call.1} parent=1 // pred_fallthru
      _
    // Predicated region
    $region38: #{tpu_custom_call.1} parent=1 // pred_check
      _
    $region39: #{tpu_custom_call.1} parent=1 // pred_check_branch
      %77 = sbr.rel (0) target = $region41
    $region40: #{tpu_custom_call.1} parent=1 // pred_region
      %78 = dma.done [#allocation6], 2048
    $region41: #{tpu_custom_call.1} parent=1 // pred_fallthru
      _
    // Predicated region
    $region42: #{tpu_custom_call.1} parent=1 // pred_check
      _
    $region43: #{tpu_custom_call.1} parent=1 // pred_check_branch
      %80 = sbr.rel (0) target = $region45
    $region44: #{tpu_custom_call.1} parent=1 // pred_region
      %81 = dma.done [#allocation9], 1024
    $region45: #{tpu_custom_call.1} parent=1 // pred_fallthru
      _
    %v83 = vld [vmem:[#allocation2] sm:$0xff]
    %v84 = vld [vmem:[#allocation2 + $0x8] sm:$0xff]
    %v85 = vld [vmem:[#allocation2 + $0x10] sm:$0xff]
    %v86 = vld [vmem:[#allocation2 + $0x18] sm:$0xff]
    %v87 = vld [vmem:[#allocation2 + $0x20] sm:$0xff]
    %v88 = vld [vmem:[#allocation2 + $0x28] sm:$0xff]
    %v89 = vld [vmem:[#allocation2 + $0x30] sm:$0xff]
    %v90 = vld [vmem:[#allocation2 + $0x38] sm:$0xff]
    %v91 = vld [vmem:[#allocation2 + $0x40] sm:$0xff]
    %v92 = vld [vmem:[#allocation2 + $0x48] sm:$0xff]
    %v93 = vld [vmem:[#allocation2 + $0x50] sm:$0xff]
    %v94 = vld [vmem:[#allocation2 + $0x58] sm:$0xff]
    %v95 = vld [vmem:[#allocation5] sm:$0xff]
    %v96 = vld [vmem:[#allocation5 + $0x8] sm:$0xff]
    %v97 = vld [vmem:[#allocation5 + $0x10] sm:$0xff]
    %v98 = vld [vmem:[#allocation5 + $0x18] sm:$0xff]
    %v99 = vld [vmem:[#allocation5 + $0x20] sm:$0xff]
    %v100 = vld [vmem:[#allocation5 + $0x28] sm:$0xff]
    %v101 = vld [vmem:[#allocation5 + $0x30] sm:$0xff]
    %v102 = vld [vmem:[#allocation5 + $0x38] sm:$0xff]
    %v103 = vld [vmem:[#allocation5 + $0x40] sm:$0xff]
    %v104 = vld [vmem:[#allocation5 + $0x48] sm:$0xff]
    %v105 = vld [vmem:[#allocation5 + $0x50] sm:$0xff]
    %v106 = vld [vmem:[#allocation5 + $0x58] sm:$0xff]
    %v107 = vld [vmem:[#allocation5 + $0x60] sm:$0xff]
    %v108 = vld [vmem:[#allocation5 + $0x68] sm:$0xff]
    %v109 = vld [vmem:[#allocation5 + $0x70] sm:$0xff]
    %v110 = vld [vmem:[#allocation5 + $0x78] sm:$0xff]
    %v111 = vld [vmem:[#allocation5 + $0x80] sm:$0xff]
    %v112 = vld [vmem:[#allocation5 + $0x88] sm:$0xff]
    %v113 = vld [vmem:[#allocation5 + $0x90] sm:$0xff]
    %v114 = vld [vmem:[#allocation5 + $0x98] sm:$0xff]
    %v115 = vld [vmem:[#allocation5 + $0xa0] sm:$0xff]
    %v116 = vld [vmem:[#allocation5 + $0xa8] sm:$0xff]
    %v117 = vld [vmem:[#allocation5 + $0xb0] sm:$0xff]
    %v118 = vld [vmem:[#allocation5 + $0xb8] sm:$0xff]
    %v119 = vld [vmem:[#allocation5 + $0xc0] sm:$0xff]
    %v120 = vld [vmem:[#allocation5 + $0xc8] sm:$0xff]
    %v121 = vld [vmem:[#allocation5 + $0xd0] sm:$0xff]
    %v122 = vld [vmem:[#allocation5 + $0xd8] sm:$0xff]
    %v123 = vld [vmem:[#allocation5 + $0xe0] sm:$0xff]
    %v124 = vld [vmem:[#allocation5 + $0xe8] sm:$0xff]
    %v125 = vld [vmem:[#allocation5 + $0xf0] sm:$0xff]
    %v126 = vld [vmem:[#allocation5 + $0xf8] sm:$0xff]
    %v127 = vld [vmem:[#allocation5 + $0x100] sm:$0xff]
    %v128 = vld [vmem:[#allocation5 + $0x108] sm:$0xff]
    %v129 = vld [vmem:[#allocation5 + $0x110] sm:$0xff]
    %v130 = vld [vmem:[#allocation5 + $0x118] sm:$0xff]
    %v131 = vld [vmem:[#allocation5 + $0x120] sm:$0xff]
    %v132 = vld [vmem:[#allocation5 + $0x128] sm:$0xff]
    %v133 = vld [vmem:[#allocation5 + $0x130] sm:$0xff]
    %v134 = vld [vmem:[#allocation5 + $0x138] sm:$0xff]
    %v135 = vld [vmem:[#allocation5 + $0x140] sm:$0xff]
    %v136 = vld [vmem:[#allocation5 + $0x148] sm:$0xff]
    %v137 = vld [vmem:[#allocation5 + $0x150] sm:$0xff]
    %v138 = vld [vmem:[#allocation5 + $0x158] sm:$0xff]
    %v139 = vld [vmem:[#allocation5 + $0x160] sm:$0xff]
    %v140 = vld [vmem:[#allocation5 + $0x168] sm:$0xff]
    %v141 = vld [vmem:[#allocation5 + $0x170] sm:$0xff]
    %v142 = vld [vmem:[#allocation5 + $0x178] sm:$0xff]
    %v143 = vld [vmem:[#allocation5 + $0x180] sm:$0xff]
    %v144 = vld [vmem:[#allocation5 + $0x188] sm:$0xff]
    %v145 = vld [vmem:[#allocation5 + $0x190] sm:$0xff]
    %v146 = vld [vmem:[#allocation5 + $0x198] sm:$0xff]
    %v147 = vld [vmem:[#allocation5 + $0x1a0] sm:$0xff]
    %v148 = vld [vmem:[#allocation5 + $0x1a8] sm:$0xff]
    %v149 = vld [vmem:[#allocation5 + $0x1b0] sm:$0xff]
    %v150 = vld [vmem:[#allocation5 + $0x1b8] sm:$0xff]
    %v151 = vld [vmem:[#allocation5 + $0x1c0] sm:$0xff]
    %v152 = vld [vmem:[#allocation5 + $0x1c8] sm:$0xff]
    %v153 = vld [vmem:[#allocation5 + $0x1d0] sm:$0xff]
    %v154 = vld [vmem:[#allocation5 + $0x1d8] sm:$0xff]
    %v155 = vld [vmem:[#allocation5 + $0x1e0] sm:$0xff]
    %v156 = vld [vmem:[#allocation5 + $0x1e8] sm:$0xff]
    %v157 = vld [vmem:[#allocation5 + $0x1f0] sm:$0xff]
    %v158 = vld [vmem:[#allocation5 + $0x1f8] sm:$0xff]
    %v159 = vld [vmem:[#allocation5 + $0x200] sm:$0xff]
    %v160 = vld [vmem:[#allocation5 + $0x208] sm:$0xff]
    %v161 = vld [vmem:[#allocation5 + $0x210] sm:$0xff]
    %v162 = vld [vmem:[#allocation5 + $0x218] sm:$0xff]
    %v163 = vld [vmem:[#allocation5 + $0x220] sm:$0xff]
    %v164 = vld [vmem:[#allocation5 + $0x228] sm:$0xff]
    %v165 = vld [vmem:[#allocation5 + $0x230] sm:$0xff]
    %v166 = vld [vmem:[#allocation5 + $0x238] sm:$0xff]
    %v167 = vld [vmem:[#allocation5 + $0x240] sm:$0xff]
    %v168 = vld [vmem:[#allocation5 + $0x248] sm:$0xff]
    %v169 = vld [vmem:[#allocation5 + $0x250] sm:$0xff]
    %v170 = vld [vmem:[#allocation5 + $0x258] sm:$0xff]
    %v171 = vld [vmem:[#allocation5 + $0x260] sm:$0xff]
    %v172 = vld [vmem:[#allocation5 + $0x268] sm:$0xff]
    %v173 = vld [vmem:[#allocation5 + $0x270] sm:$0xff]
    %v174 = vld [vmem:[#allocation5 + $0x278] sm:$0xff]
    %v175 = vld [vmem:[#allocation5 + $0x280] sm:$0xff]
    %v176 = vld [vmem:[#allocation5 + $0x288] sm:$0xff]
    %v177 = vld [vmem:[#allocation5 + $0x290] sm:$0xff]
    %v178 = vld [vmem:[#allocation5 + $0x298] sm:$0xff]
    %v179 = vld [vmem:[#allocation5 + $0x2a0] sm:$0xff]
    %v180 = vld [vmem:[#allocation5 + $0x2a8] sm:$0xff]
    %v181 = vld [vmem:[#allocation5 + $0x2b0] sm:$0xff]
    %v182 = vld [vmem:[#allocation5 + $0x2b8] sm:$0xff]
    %v183 = vld [vmem:[#allocation5 + $0x2c0] sm:$0xff]
    %v184 = vld [vmem:[#allocation5 + $0x2c8] sm:$0xff]
    %v185 = vld [vmem:[#allocation5 + $0x2d0] sm:$0xff]
    %v186 = vld [vmem:[#allocation5 + $0x2d8] sm:$0xff]
    %v187 = vld [vmem:[#allocation5 + $0x2e0] sm:$0xff]
    %v188 = vld [vmem:[#allocation5 + $0x2e8] sm:$0xff]
    %v189 = vld [vmem:[#allocation5 + $0x2f0] sm:$0xff]
    %v190 = vld [vmem:[#allocation5 + $0x2f8] sm:$0xff]
    %v191 = vld [vmem:[%s2] sm:$0x3]
    %v193 = vlaneseq
    %v194 = vshrl.u32 %v193, 7
    %v195 = vsub.s32 0, %v194
    %v196 = vrot.slane %v191, %v195
    %v197 = vlaneseq
    %v198 = vshrl.u32 %v197, 7
    %v199 = vsub.s32 1, %v198
    %v200 = vrot.slane %v191, %v199
    %v215 = vunpack.c.l.b16 %v83
    %v216 = vunpack.c.h.b16 %v83
    %v217 = vunpack.c.l.b16 %v84
    %v218 = vunpack.c.h.b16 %v84
    %v219 = vunpack.c.l.b16 %v85
    %v220 = vunpack.c.h.b16 %v85
    %v221 = vunpack.c.l.b16 %v86
    %v222 = vunpack.c.h.b16 %v86
    %v223 = vunpack.c.l.b16 %v87
    %v224 = vunpack.c.h.b16 %v87
    %v225 = vunpack.c.l.b16 %v88
    %v226 = vunpack.c.h.b16 %v88
    %v227 = vunpack.c.l.b16 %v89
    %v228 = vunpack.c.h.b16 %v89
    %v229 = vunpack.c.l.b16 %v90
    %v230 = vunpack.c.h.b16 %v90
    %v231 = vunpack.c.l.b16 %v91
    %v232 = vunpack.c.h.b16 %v91
    %v233 = vunpack.c.l.b16 %v92
    %v234 = vunpack.c.h.b16 %v92
    %v235 = vunpack.c.l.b16 %v93
    %v236 = vunpack.c.h.b16 %v93
    %v237 = vunpack.c.l.b16 %v94
    %v238 = vunpack.c.h.b16 %v94
    %v239 = vpack.c.b16 %v221, %v215
    %v240 = vpack.c.b16 %v222, %v216
    %v241 = vpack.c.b16 %v223, %v217
    %v242 = vpack.c.b16 %v224, %v218
    %v243 = vpack.c.b16 %v225, %v219
    %v244 = vpack.c.b16 %v226, %v220
    %v245 = vpack.c.b16 %v233, %v227
    %v246 = vpack.c.b16 %v234, %v228
    %v247 = vpack.c.b16 %v235, %v229
    %v248 = vpack.c.b16 %v236, %v230
    %v249 = vpack.c.b16 %v237, %v231
    %v250 = vpack.c.b16 %v238, %v232
    %v359 = vunpack.c.l.b16 %v95
    %v360 = vunpack.c.h.b16 %v95
    %v361 = vunpack.c.l.b16 %v96
    %v362 = vunpack.c.h.b16 %v96
    %v363 = vunpack.c.l.b16 %v97
    %v364 = vunpack.c.h.b16 %v97
    %v365 = vunpack.c.l.b16 %v98
    %v366 = vunpack.c.h.b16 %v98
    %v367 = vunpack.c.l.b16 %v99
    %v368 = vunpack.c.h.b16 %v99
    %v369 = vunpack.c.l.b16 %v100
    %v370 = vunpack.c.h.b16 %v100
    %v371 = vunpack.c.l.b16 %v101
    %v372 = vunpack.c.h.b16 %v101
    %v373 = vunpack.c.l.b16 %v102
    %v374 = vunpack.c.h.b16 %v102
    %v375 = vunpack.c.l.b16 %v103
    %v376 = vunpack.c.h.b16 %v103
    %v377 = vunpack.c.l.b16 %v104
    %v378 = vunpack.c.h.b16 %v104
    %v379 = vunpack.c.l.b16 %v105
    %v380 = vunpack.c.h.b16 %v105
    %v381 = vunpack.c.l.b16 %v106
    %v382 = vunpack.c.h.b16 %v106
    %v383 = vunpack.c.l.b16 %v107
    %v384 = vunpack.c.h.b16 %v107
    %v385 = vunpack.c.l.b16 %v108
    %v386 = vunpack.c.h.b16 %v108
    %v387 = vunpack.c.l.b16 %v109
    %v388 = vunpack.c.h.b16 %v109
    %v389 = vunpack.c.l.b16 %v110
    %v390 = vunpack.c.h.b16 %v110
    %v391 = vunpack.c.l.b16 %v111
    %v392 = vunpack.c.h.b16 %v111
    %v393 = vunpack.c.l.b16 %v112
    %v394 = vunpack.c.h.b16 %v112
    %v395 = vunpack.c.l.b16 %v113
    %v396 = vunpack.c.h.b16 %v113
    %v397 = vunpack.c.l.b16 %v114
    %v398 = vunpack.c.h.b16 %v114
    %v399 = vunpack.c.l.b16 %v115
    %v400 = vunpack.c.h.b16 %v115
    %v401 = vunpack.c.l.b16 %v116
    %v402 = vunpack.c.h.b16 %v116
    %v403 = vunpack.c.l.b16 %v117
    %v404 = vunpack.c.h.b16 %v117
    %v405 = vunpack.c.l.b16 %v118
    %v406 = vunpack.c.h.b16 %v118
    %v407 = vunpack.c.l.b16 %v119
    %v408 = vunpack.c.h.b16 %v119
    %v409 = vunpack.c.l.b16 %v120
    %v410 = vunpack.c.h.b16 %v120
    %v411 = vunpack.c.l.b16 %v121
    %v412 = vunpack.c.h.b16 %v121
    %v413 = vunpack.c.l.b16 %v122
    %v414 = vunpack.c.h.b16 %v122
    %v415 = vunpack.c.l.b16 %v123
    %v416 = vunpack.c.h.b16 %v123
    %v417 = vunpack.c.l.b16 %v124
    %v418 = vunpack.c.h.b16 %v124
    %v419 = vunpack.c.l.b16 %v125
    %v420 = vunpack.c.h.b16 %v125
    %v421 = vunpack.c.l.b16 %v126
    %v422 = vunpack.c.h.b16 %v126
    %v423 = vunpack.c.l.b16 %v127
    %v424 = vunpack.c.h.b16 %v127
    %v425 = vunpack.c.l.b16 %v128
    %v426 = vunpack.c.h.b16 %v128
    %v427 = vunpack.c.l.b16 %v129
    %v428 = vunpack.c.h.b16 %v129
    %v429 = vunpack.c.l.b16 %v130
    %v430 = vunpack.c.h.b16 %v130
    %v431 = vunpack.c.l.b16 %v131
    %v432 = vunpack.c.h.b16 %v131
    %v433 = vunpack.c.l.b16 %v132
    %v434 = vunpack.c.h.b16 %v132
    %v435 = vunpack.c.l.b16 %v133
    %v436 = vunpack.c.h.b16 %v133
    %v437 = vunpack.c.l.b16 %v134
    %v438 = vunpack.c.h.b16 %v134
    %v439 = vunpack.c.l.b16 %v135
    %v440 = vunpack.c.h.b16 %v135
    %v441 = vunpack.c.l.b16 %v136
    %v442 = vunpack.c.h.b16 %v136
    %v443 = vunpack.c.l.b16 %v137
    %v444 = vunpack.c.h.b16 %v137
    %v445 = vunpack.c.l.b16 %v138
    %v446 = vunpack.c.h.b16 %v138
    %v447 = vunpack.c.l.b16 %v139
    %v448 = vunpack.c.h.b16 %v139
    %v449 = vunpack.c.l.b16 %v140
    %v450 = vunpack.c.h.b16 %v140
    %v451 = vunpack.c.l.b16 %v141
    %v452 = vunpack.c.h.b16 %v141
    %v453 = vunpack.c.l.b16 %v142
    %v454 = vunpack.c.h.b16 %v142
    %v455 = vunpack.c.l.b16 %v143
    %v456 = vunpack.c.h.b16 %v143
    %v457 = vunpack.c.l.b16 %v144
    %v458 = vunpack.c.h.b16 %v144
    %v459 = vunpack.c.l.b16 %v145
    %v460 = vunpack.c.h.b16 %v145
    %v461 = vunpack.c.l.b16 %v146
    %v462 = vunpack.c.h.b16 %v146
    %v463 = vunpack.c.l.b16 %v147
    %v464 = vunpack.c.h.b16 %v147
    %v465 = vunpack.c.l.b16 %v148
    %v466 = vunpack.c.h.b16 %v148
    %v467 = vunpack.c.l.b16 %v149
    %v468 = vunpack.c.h.b16 %v149
    %v469 = vunpack.c.l.b16 %v150
    %v470 = vunpack.c.h.b16 %v150
    %v471 = vunpack.c.l.b16 %v151
    %v472 = vunpack.c.h.b16 %v151
    %v473 = vunpack.c.l.b16 %v152
    %v474 = vunpack.c.h.b16 %v152
    %v475 = vunpack.c.l.b16 %v153
    %v476 = vunpack.c.h.b16 %v153
    %v477 = vunpack.c.l.b16 %v154
    %v478 = vunpack.c.h.b16 %v154
    %v479 = vunpack.c.l.b16 %v155
    %v480 = vunpack.c.h.b16 %v155
    %v481 = vunpack.c.l.b16 %v156
    %v482 = vunpack.c.h.b16 %v156
    %v483 = vunpack.c.l.b16 %v157
    %v484 = vunpack.c.h.b16 %v157
    %v485 = vunpack.c.l.b16 %v158
    %v486 = vunpack.c.h.b16 %v158
    %v487 = vunpack.c.l.b16 %v159
    %v488 = vunpack.c.h.b16 %v159
    %v489 = vunpack.c.l.b16 %v160
    %v490 = vunpack.c.h.b16 %v160
    %v491 = vunpack.c.l.b16 %v161
    %v492 = vunpack.c.h.b16 %v161
    %v493 = vunpack.c.l.b16 %v162
    %v494 = vunpack.c.h.b16 %v162
    %v495 = vunpack.c.l.b16 %v163
    %v496 = vunpack.c.h.b16 %v163
    %v497 = vunpack.c.l.b16 %v164
    %v498 = vunpack.c.h.b16 %v164
    %v499 = vunpack.c.l.b16 %v165
    %v500 = vunpack.c.h.b16 %v165
    %v501 = vunpack.c.l.b16 %v166
    %v502 = vunpack.c.h.b16 %v166
    %v503 = vunpack.c.l.b16 %v167
    %v504 = vunpack.c.h.b16 %v167
    %v505 = vunpack.c.l.b16 %v168
    %v506 = vunpack.c.h.b16 %v168
    %v507 = vunpack.c.l.b16 %v169
    %v508 = vunpack.c.h.b16 %v169
    %v509 = vunpack.c.l.b16 %v170
    %v510 = vunpack.c.h.b16 %v170
    %v511 = vunpack.c.l.b16 %v171
    %v512 = vunpack.c.h.b16 %v171
    %v513 = vunpack.c.l.b16 %v172
    %v514 = vunpack.c.h.b16 %v172
    %v515 = vunpack.c.l.b16 %v173
    %v516 = vunpack.c.h.b16 %v173
    %v517 = vunpack.c.l.b16 %v174
    %v518 = vunpack.c.h.b16 %v174
    %v519 = vunpack.c.l.b16 %v175
    %v520 = vunpack.c.h.b16 %v175
    %v521 = vunpack.c.l.b16 %v176
    %v522 = vunpack.c.h.b16 %v176
    %v523 = vunpack.c.l.b16 %v177
    %v524 = vunpack.c.h.b16 %v177
    %v525 = vunpack.c.l.b16 %v178
    %v526 = vunpack.c.h.b16 %v178
    %v527 = vunpack.c.l.b16 %v179
    %v528 = vunpack.c.h.b16 %v179
    %v529 = vunpack.c.l.b16 %v180
    %v530 = vunpack.c.h.b16 %v180
    %v531 = vunpack.c.l.b16 %v181
    %v532 = vunpack.c.h.b16 %v181
    %v533 = vunpack.c.l.b16 %v182
    %v534 = vunpack.c.h.b16 %v182
    %v535 = vunpack.c.l.b16 %v183
    %v536 = vunpack.c.h.b16 %v183
    %v537 = vunpack.c.l.b16 %v184
    %v538 = vunpack.c.h.b16 %v184
    %v539 = vunpack.c.l.b16 %v185
    %v540 = vunpack.c.h.b16 %v185
    %v541 = vunpack.c.l.b16 %v186
    %v542 = vunpack.c.h.b16 %v186
    %v543 = vunpack.c.l.b16 %v187
    %v544 = vunpack.c.h.b16 %v187
    %v545 = vunpack.c.l.b16 %v188
    %v546 = vunpack.c.h.b16 %v188
    %v547 = vunpack.c.l.b16 %v189
    %v548 = vunpack.c.h.b16 %v189
    %v549 = vunpack.c.l.b16 %v190
    %v550 = vunpack.c.h.b16 %v190
    %v551 = vpack.c.b16 %v361, %v359
    %v552 = vpack.c.b16 %v362, %v360
    %v553 = vpack.c.b16 %v365, %v363
    %v554 = vpack.c.b16 %v366, %v364
    %v555 = vpack.c.b16 %v369, %v367
    %v556 = vpack.c.b16 %v370, %v368
    %v557 = vpack.c.b16 %v373, %v371
    %v558 = vpack.c.b16 %v374, %v372
    %v559 = vpack.c.b16 %v377, %v375
    %v560 = vpack.c.b16 %v378, %v376
    %v561 = vpack.c.b16 %v381, %v379
    %v562 = vpack.c.b16 %v382, %v380
    %v563 = vpack.c.b16 %v385, %v383
    %v564 = vpack.c.b16 %v386, %v384
    %v565 = vpack.c.b16 %v389, %v387
    %v566 = vpack.c.b16 %v390, %v388
    %v567 = vpack.c.b16 %v393, %v391
    %v568 = vpack.c.b16 %v394, %v392
    %v569 = vpack.c.b16 %v397, %v395
    %v570 = vpack.c.b16 %v398, %v396
    %v571 = vpack.c.b16 %v401, %v399
    %v572 = vpack.c.b16 %v402, %v400
    %v573 = vpack.c.b16 %v405, %v403
    %v574 = vpack.c.b16 %v406, %v404
    %v575 = vpack.c.b16 %v409, %v407
    %v576 = vpack.c.b16 %v410, %v408
    %v577 = vpack.c.b16 %v413, %v411
    %v578 = vpack.c.b16 %v414, %v412
    %v579 = vpack.c.b16 %v417, %v415
    %v580 = vpack.c.b16 %v418, %v416
    %v581 = vpack.c.b16 %v421, %v419
    %v582 = vpack.c.b16 %v422, %v420
    %v583 = vpack.c.b16 %v425, %v423
    %v584 = vpack.c.b16 %v426, %v424
    %v585 = vpack.c.b16 %v429, %v427
    %v586 = vpack.c.b16 %v430, %v428
    %v587 = vpack.c.b16 %v433, %v431
    %v588 = vpack.c.b16 %v434, %v432
    %v589 = vpack.c.b16 %v437, %v435
    %v590 = vpack.c.b16 %v438, %v436
    %v591 = vpack.c.b16 %v441, %v439
    %v592 = vpack.c.b16 %v442, %v440
    %v593 = vpack.c.b16 %v445, %v443
    %v594 = vpack.c.b16 %v446, %v444
    %v595 = vpack.c.b16 %v449, %v447
    %v596 = vpack.c.b16 %v450, %v448
    %v597 = vpack.c.b16 %v453, %v451
    %v598 = vpack.c.b16 %v454, %v452
    %v599 = vpack.c.b16 %v457, %v455
    %v600 = vpack.c.b16 %v458, %v456
    %v601 = vpack.c.b16 %v461, %v459
    %v602 = vpack.c.b16 %v462, %v460
    %v603 = vpack.c.b16 %v465, %v463
    %v604 = vpack.c.b16 %v466, %v464
    %v605 = vpack.c.b16 %v469, %v467
    %v606 = vpack.c.b16 %v470, %v468
    %v607 = vpack.c.b16 %v473, %v471
    %v608 = vpack.c.b16 %v474, %v472
    %v609 = vpack.c.b16 %v477, %v475
    %v610 = vpack.c.b16 %v478, %v476
    %v611 = vpack.c.b16 %v481, %v479
    %v612 = vpack.c.b16 %v482, %v480
    %v613 = vpack.c.b16 %v485, %v483
    %v614 = vpack.c.b16 %v486, %v484
    %v615 = vpack.c.b16 %v489, %v487
    %v616 = vpack.c.b16 %v490, %v488
    %v617 = vpack.c.b16 %v493, %v491
    %v618 = vpack.c.b16 %v494, %v492
    %v619 = vpack.c.b16 %v497, %v495
    %v620 = vpack.c.b16 %v498, %v496
    %v621 = vpack.c.b16 %v501, %v499
    %v622 = vpack.c.b16 %v502, %v500
    %v623 = vpack.c.b16 %v505, %v503
    %v624 = vpack.c.b16 %v506, %v504
    %v625 = vpack.c.b16 %v509, %v507
    %v626 = vpack.c.b16 %v510, %v508
    %v627 = vpack.c.b16 %v513, %v511
    %v628 = vpack.c.b16 %v514, %v512
    %v629 = vpack.c.b16 %v517, %v515
    %v630 = vpack.c.b16 %v518, %v516
    %v631 = vpack.c.b16 %v521, %v519
    %v632 = vpack.c.b16 %v522, %v520
    %v633 = vpack.c.b16 %v525, %v523
    %v634 = vpack.c.b16 %v526, %v524
    %v635 = vpack.c.b16 %v529, %v527
    %v636 = vpack.c.b16 %v530, %v528
    %v637 = vpack.c.b16 %v533, %v531
    %v638 = vpack.c.b16 %v534, %v532
    %v639 = vpack.c.b16 %v537, %v535
    %v640 = vpack.c.b16 %v538, %v536
    %v641 = vpack.c.b16 %v541, %v539
    %v642 = vpack.c.b16 %v542, %v540
    %v643 = vpack.c.b16 %v545, %v543
    %v644 = vpack.c.b16 %v546, %v544
    %v645 = vpack.c.b16 %v549, %v547
    %v646 = vpack.c.b16 %v550, %v548
    %743 = vmatprep.subr.bf16.mxu0 %v552
    %744 = vmatpush1.bf16.msra.mxu0 %v551
    %745 = vmatprep.subr.bf16.mxu0 %v554
    %746 = vmatpush1.bf16.msra.mxu0 %v553
    %747 = vmatprep.subr.bf16.mxu0 %v556
    %748 = vmatpush1.bf16.msra.mxu0 %v555
    %749 = vmatprep.subr.bf16.mxu0 %v558
    %750 = vmatpush1.bf16.msra.mxu0 %v557
    %751 = vmatprep.subr.bf16.mxu0 %v560
    %752 = vmatpush1.bf16.msra.mxu0 %v559
    %753 = vmatprep.subr.bf16.mxu0 %v562
    %754 = vmatpush1.bf16.msra.mxu0 %v561
    %755 = vmatprep.subr.bf16.mxu0 %v564
    %756 = vmatpush1.bf16.msra.mxu0 %v563
    %757 = vmatprep.subr.bf16.mxu0 %v566
    %758 = vmatpush1.bf16.msra.mxu0 %v565
    %759 = vmatprep.subr.bf16.mxu0 %v568
    %760 = vmatpush1.bf16.msra.mxu0 %v567
    %761 = vmatprep.subr.bf16.mxu0 %v570
    %762 = vmatpush1.bf16.msra.mxu0 %v569
    %763 = vmatprep.subr.bf16.mxu0 %v572
    %764 = vmatpush1.bf16.msra.mxu0 %v571
    %765 = vmatprep.subr.bf16.mxu0 %v574
    %766 = vmatpush1.bf16.msra.mxu0 %v573
    %767 = vmatprep.subr.bf16.mxu0 %v576
    %768 = vmatpush1.bf16.msra.mxu0 %v575
    %769 = vmatprep.subr.bf16.mxu0 %v578
    %770 = vmatpush1.bf16.msra.mxu0 %v577
    %771 = vmatprep.subr.bf16.mxu0 %v580
    %772 = vmatpush1.bf16.msra.mxu0 %v579
    %773 = vmatprep.subr.bf16.mxu0 %v582
    %774 = vmatpush1.bf16.msra.mxu0 %v581
    %775 = vmatprep.mubr.bf16.mxu0 %v240
    %776 = vmatmul.mubr.bf16.gmra.mrb[0].mxu0 %v239
    %v777 = vpop.f32.mrb[0].mxu0
    %v778 = vadd.f32 %v196, %v777
    %v779 = vpop.f32.mrb[0].mxu0
    %v780 = vadd.f32 %v200, %v779
    %v781 = vpop.f32.mrb[0].mxu0
    %v782 = vadd.f32 %v196, %v781
    %v783 = vpop.f32.mrb[0].mxu0
    %v784 = vadd.f32 %v200, %v783
    %785 = vmatprep.mubr.bf16.mxu0 %v246
    %786 = vmatmul.mubr.bf16.gmra.mrb[0].mxu0 %v245
    %v787 = vpop.f32.mrb[0].mxu0
    %v788 = vadd.f32 %v196, %v787
    %v789 = vpop.f32.mrb[0].mxu0
    %v790 = vadd.f32 %v200, %v789
    %v791 = vpop.f32.mrb[0].mxu0
    %v792 = vadd.f32 %v196, %v791
    %v793 = vpop.f32.mrb[0].mxu0
    %v794 = vadd.f32 %v200, %v793
    %795 = vdwg.mxu0
    %796 = vmatprep.subr.bf16.mxu0 %v584
    %797 = vmatpush1.bf16.msra.mxu0 %v583
    %798 = vmatprep.subr.bf16.mxu0 %v586
    %799 = vmatpush1.bf16.msra.mxu0 %v585
    %800 = vmatprep.subr.bf16.mxu0 %v588
    %801 = vmatpush1.bf16.msra.mxu0 %v587
    %802 = vmatprep.subr.bf16.mxu0 %v590
    %803 = vmatpush1.bf16.msra.mxu0 %v589
    %804 = vmatprep.subr.bf16.mxu0 %v592
    %805 = vmatpush1.bf16.msra.mxu0 %v591
    %806 = vmatprep.subr.bf16.mxu0 %v594
    %807 = vmatpush1.bf16.msra.mxu0 %v593
    %808 = vmatprep.subr.bf16.mxu0 %v596
    %809 = vmatpush1.bf16.msra.mxu0 %v595
    %810 = vmatprep.subr.bf16.mxu0 %v598
    %811 = vmatpush1.bf16.msra.mxu0 %v597
    %812 = vmatprep.subr.bf16.mxu0 %v600
    %813 = vmatpush1.bf16.msra.mxu0 %v599
    %814 = vmatprep.subr.bf16.mxu0 %v602
    %815 = vmatpush1.bf16.msra.mxu0 %v601
    %816 = vmatprep.subr.bf16.mxu0 %v604
    %817 = vmatpush1.bf16.msra.mxu0 %v603
    %818 = vmatprep.subr.bf16.mxu0 %v606
    %819 = vmatpush1.bf16.msra.mxu0 %v605
    %820 = vmatprep.subr.bf16.mxu0 %v608
    %821 = vmatpush1.bf16.msra.mxu0 %v607
    %822 = vmatprep.subr.bf16.mxu0 %v610
    %823 = vmatpush1.bf16.msra.mxu0 %v609
    %824 = vmatprep.subr.bf16.mxu0 %v612
    %825 = vmatpush1.bf16.msra.mxu0 %v611
    %826 = vmatprep.subr.bf16.mxu0 %v614
    %827 = vmatpush1.bf16.msra.mxu0 %v613
    %828 = vmatprep.mubr.bf16.mxu0 %v242
    %829 = vmatmul.mubr.bf16.gmra.mrb[0].mxu0 %v241
    %v830 = vpop.f32.mrb[0].mxu0
    %v831 = vadd.f32 %v778, %v830
    %v832 = vpop.f32.mrb[0].mxu0
    %v833 = vadd.f32 %v780, %v832
    %v834 = vpop.f32.mrb[0].mxu0
    %v835 = vadd.f32 %v782, %v834
    %v836 = vpop.f32.mrb[0].mxu0
    %v837 = vadd.f32 %v784, %v836
    %838 = vmatprep.mubr.bf16.mxu0 %v248
    %839 = vmatmul.mubr.bf16.gmra.mrb[0].mxu0 %v247
    %v840 = vpop.f32.mrb[0].mxu0
    %v841 = vadd.f32 %v788, %v840
    %v842 = vpop.f32.mrb[0].mxu0
    %v843 = vadd.f32 %v790, %v842
    %v844 = vpop.f32.mrb[0].mxu0
    %v845 = vadd.f32 %v792, %v844
    %v846 = vpop.f32.mrb[0].mxu0
    %v847 = vadd.f32 %v794, %v846
    %848 = vdwg.mxu0
    %849 = vmatprep.subr.bf16.mxu0 %v616
    %850 = vmatpush1.bf16.msra.mxu0 %v615
    %851 = vmatprep.subr.bf16.mxu0 %v618
    %852 = vmatpush1.bf16.msra.mxu0 %v617
    %853 = vmatprep.subr.bf16.mxu0 %v620
    %854 = vmatpush1.bf16.msra.mxu0 %v619
    %855 = vmatprep.subr.bf16.mxu0 %v622
    %856 = vmatpush1.bf16.msra.mxu0 %v621
    %857 = vmatprep.subr.bf16.mxu0 %v624
    %858 = vmatpush1.bf16.msra.mxu0 %v623
    %859 = vmatprep.subr.bf16.mxu0 %v626
    %860 = vmatpush1.bf16.msra.mxu0 %v625
    %861 = vmatprep.subr.bf16.mxu0 %v628
    %862 = vmatpush1.bf16.msra.mxu0 %v627
    %863 = vmatprep.subr.bf16.mxu0 %v630
    %864 = vmatpush1.bf16.msra.mxu0 %v629
    %865 = vmatprep.subr.bf16.mxu0 %v632
    %866 = vmatpush1.bf16.msra.mxu0 %v631
    %867 = vmatprep.subr.bf16.mxu0 %v634
    %868 = vmatpush1.bf16.msra.mxu0 %v633
    %869 = vmatprep.subr.bf16.mxu0 %v636
    %870 = vmatpush1.bf16.msra.mxu0 %v635
    %871 = vmatprep.subr.bf16.mxu0 %v638
    %872 = vmatpush1.bf16.msra.mxu0 %v637
    %873 = vmatprep.subr.bf16.mxu0 %v640
    %874 = vmatpush1.bf16.msra.mxu0 %v639
    %875 = vmatprep.subr.bf16.mxu0 %v642
    %876 = vmatpush1.bf16.msra.mxu0 %v641
    %877 = vmatprep.subr.bf16.mxu0 %v644
    %878 = vmatpush1.bf16.msra.mxu0 %v643
    %879 = vmatprep.subr.bf16.mxu0 %v646
    %880 = vmatpush1.bf16.msra.mxu0 %v645
    %881 = vmatprep.mubr.bf16.mxu0 %v244
    %882 = vmatmul.mubr.bf16.gmra.mrb[0].mxu0 %v243
    %v883 = vpop.f32.mrb[0].mxu0
    %v884 = vadd.f32 %v831, %v883
    %v885 = vpop.f32.mrb[0].mxu0
    %v886 = vadd.f32 %v833, %v885
    %v887 = vpop.f32.mrb[0].mxu0
    %v888 = vadd.f32 %v835, %v887
    %v889 = vpop.f32.mrb[0].mxu0
    %v890 = vadd.f32 %v837, %v889
    %891 = vmatprep.mubr.bf16.mxu0 %v250
    %892 = vmatmul.mubr.bf16.gmra.mrb[0].mxu0 %v249
    %v893 = vpop.f32.mrb[0].mxu0
    %v894 = vadd.f32 %v841, %v893
    %v895 = vpop.f32.mrb[0].mxu0
    %v896 = vadd.f32 %v843, %v895
    %v897 = vpop.f32.mrb[0].mxu0
    %v898 = vadd.f32 %v845, %v897
    %v899 = vpop.f32.mrb[0].mxu0
    %v900 = vadd.f32 %v847, %v899
    %901 = vdwg.mxu0
    %v902 = vmax.f32 %v884, 0.0
    %v903 = vmax.f32 %v886, 0.0
    %v904 = vmax.f32 %v888, 0.0
    %v905 = vmax.f32 %v890, 0.0
    %v906 = vmax.f32 %v894, 0.0
    %v907 = vmax.f32 %v896, 0.0
    %v908 = vmax.f32 %v898, 0.0
    %v909 = vmax.f32 %v900, 0.0
    %v910 = vpack.c.bf16 %v904, %v902
    %v911 = vpack.c.bf16 %v905, %v903
    %v912 = vpack.c.bf16 %v908, %v906
    %v913 = vpack.c.bf16 %v909, %v907
    %v914 = vld [vmem:[#allocation7] sm:$0xf]
    %v915 = vld [vmem:[#allocation7 + $0x4] sm:$0xf]
    %v916 = vld [vmem:[#allocation7 + $0x8] sm:$0xf]
    %v917 = vld [vmem:[#allocation7 + $0xc] sm:$0xf]
    %v918 = vld [vmem:[#allocation7 + $0x10] sm:$0xf]
    %v919 = vld [vmem:[#allocation7 + $0x14] sm:$0xf]
    %v920 = vld [vmem:[#allocation7 + $0x18] sm:$0xf]
    %v921 = vld [vmem:[#allocation7 + $0x1c] sm:$0xf]
    %v922 = vld [vmem:[#allocation7 + $0x20] sm:$0xf]
    %v923 = vld [vmem:[#allocation7 + $0x24] sm:$0xf]
    %v924 = vld [vmem:[#allocation7 + $0x28] sm:$0xf]
    %v925 = vld [vmem:[#allocation7 + $0x2c] sm:$0xf]
    %v926 = vld [vmem:[#allocation7 + $0x30] sm:$0xf]
    %v927 = vld [vmem:[#allocation7 + $0x34] sm:$0xf]
    %v928 = vld [vmem:[#allocation7 + $0x38] sm:$0xf]
    %v929 = vld [vmem:[#allocation7 + $0x3c] sm:$0xf]
    %v930 = vld [vmem:[#allocation7 + $0x40] sm:$0xf]
    %v931 = vld [vmem:[#allocation7 + $0x44] sm:$0xf]
    %v932 = vld [vmem:[#allocation7 + $0x48] sm:$0xf]
    %v933 = vld [vmem:[#allocation7 + $0x4c] sm:$0xf]
    %v934 = vld [vmem:[#allocation7 + $0x50] sm:$0xf]
    %v935 = vld [vmem:[#allocation7 + $0x54] sm:$0xf]
    %v936 = vld [vmem:[#allocation7 + $0x58] sm:$0xf]
    %v937 = vld [vmem:[#allocation7 + $0x5c] sm:$0xf]
    %v938 = vld [vmem:[#allocation7 + $0x60] sm:$0xf]
    %v939 = vld [vmem:[#allocation7 + $0x64] sm:$0xf]
    %v940 = vld [vmem:[#allocation7 + $0x68] sm:$0xf]
    %v941 = vld [vmem:[#allocation7 + $0x6c] sm:$0xf]
    %v942 = vld [vmem:[#allocation7 + $0x70] sm:$0xf]
    %v943 = vld [vmem:[#allocation7 + $0x74] sm:$0xf]
    %v944 = vld [vmem:[#allocation7 + $0x78] sm:$0xf]
    %v945 = vld [vmem:[#allocation7 + $0x7c] sm:$0xf]
    %v946 = vld [vmem:[%s4] sm:$0x1]
    %v948 = vlaneseq
    %v949 = vshrl.u32 %v948, 7
    %v950 = vsub.s32 0, %v949
    %v951 = vrot.slane %v946, %v950
    %v985 = vunpack.c.l.b16 %v914
    %v986 = vunpack.c.l.b16 %v915
    %v987 = vunpack.c.l.b16 %v916
    %v988 = vunpack.c.l.b16 %v917
    %v989 = vunpack.c.l.b16 %v918
    %v990 = vunpack.c.l.b16 %v919
    %v991 = vunpack.c.l.b16 %v920
    %v992 = vunpack.c.l.b16 %v921
    %v993 = vunpack.c.l.b16 %v922
    %v994 = vunpack.c.l.b16 %v923
    %v995 = vunpack.c.l.b16 %v924
    %v996 = vunpack.c.l.b16 %v925
    %v997 = vunpack.c.l.b16 %v926
    %v998 = vunpack.c.l.b16 %v927
    %v999 = vunpack.c.l.b16 %v928
    %v1000 = vunpack.c.l.b16 %v929
    %v1001 = vunpack.c.l.b16 %v930
    %v1002 = vunpack.c.l.b16 %v931
    %v1003 = vunpack.c.l.b16 %v932
    %v1004 = vunpack.c.l.b16 %v933
    %v1005 = vunpack.c.l.b16 %v934
    %v1006 = vunpack.c.l.b16 %v935
    %v1007 = vunpack.c.l.b16 %v936
    %v1008 = vunpack.c.l.b16 %v937
    %v1009 = vunpack.c.l.b16 %v938
    %v1010 = vunpack.c.l.b16 %v939
    %v1011 = vunpack.c.l.b16 %v940
    %v1012 = vunpack.c.l.b16 %v941
    %v1013 = vunpack.c.l.b16 %v942
    %v1014 = vunpack.c.l.b16 %v943
    %v1015 = vunpack.c.l.b16 %v944
    %v1016 = vunpack.c.l.b16 %v945
    %v1017 = vpack.c.b16 %v986, %v985
    %v1018 = vpack.c.b16 %v988, %v987
    %v1019 = vpack.c.b16 %v990, %v989
    %v1020 = vpack.c.b16 %v992, %v991
    %v1021 = vpack.c.b16 %v994, %v993
    %v1022 = vpack.c.b16 %v996, %v995
    %v1023 = vpack.c.b16 %v998, %v997
    %v1024 = vpack.c.b16 %v1000, %v999
    %v1025 = vpack.c.b16 %v1002, %v1001
    %v1026 = vpack.c.b16 %v1004, %v1003
    %v1027 = vpack.c.b16 %v1006, %v1005
    %v1028 = vpack.c.b16 %v1008, %v1007
    %v1029 = vpack.c.b16 %v1010, %v1009
    %v1030 = vpack.c.b16 %v1012, %v1011
    %v1031 = vpack.c.b16 %v1014, %v1013
    %v1032 = vpack.c.b16 %v1016, %v1015
    %1049 = vmatprep.subr.bf16.mxu0 0
    %1050 = vmatpush1.bf16.msra.mxu0 %v1017
    %1051 = vmatprep.subr.bf16.mxu0 0
    %1052 = vmatpush1.bf16.msra.mxu0 %v1018
    %1053 = vmatprep.subr.bf16.mxu0 0
    %1054 = vmatpush1.bf16.msra.mxu0 %v1019
    %1055 = vmatprep.subr.bf16.mxu0 0
    %1056 = vmatpush1.bf16.msra.mxu0 %v1020
    %1057 = vmatprep.subr.bf16.mxu0 0
    %1058 = vmatpush1.bf16.msra.mxu0 %v1021
    %1059 = vmatprep.subr.bf16.mxu0 0
    %1060 = vmatpush1.bf16.msra.mxu0 %v1022
    %1061 = vmatprep.subr.bf16.mxu0 0
    %1062 = vmatpush1.bf16.msra.mxu0 %v1023
    %1063 = vmatprep.subr.bf16.mxu0 0
    %1064 = vmatpush1.bf16.msra.mxu0 %v1024
    %1065 = vmatprep.subr.bf16.mxu0 0
    %1066 = vmatpush1.bf16.msra.mxu0 %v1025
    %1067 = vmatprep.subr.bf16.mxu0 0
    %1068 = vmatpush1.bf16.msra.mxu0 %v1026
    %1069 = vmatprep.subr.bf16.mxu0 0
    %1070 = vmatpush1.bf16.msra.mxu0 %v1027
    %1071 = vmatprep.subr.bf16.mxu0 0
    %1072 = vmatpush1.bf16.msra.mxu0 %v1028
    %1073 = vmatprep.subr.bf16.mxu0 0
    %1074 = vmatpush1.bf16.msra.mxu0 %v1029
    %1075 = vmatprep.subr.bf16.mxu0 0
    %1076 = vmatpush1.bf16.msra.mxu0 %v1030
    %1077 = vmatprep.subr.bf16.mxu0 0
    %1078 = vmatpush1.bf16.msra.mxu0 %v1031
    %1079 = vmatprep.subr.bf16.mxu0 0
    %1080 = vmatpush1.bf16.msra.mxu0 %v1032
    %1081 = vmatprep.mubr.bf16.mxu0 %v911
    %1082 = vmatmul.mubr.bf16.gmra.mrb[0].mxu0 %v910
    %v1083 = vpop.f32.mrb[0].mxu0
    %v1084 = vadd.f32 %v951, %v1083
    %v1085 = vpop.f32.mrb[0].mxu0
    %v1086 = vpop.f32.mrb[0].mxu0
    %v1087 = vadd.f32 %v951, %v1086
    %v1088 = vpop.f32.mrb[0].mxu0
    %1089 = vmatprep.mubr.bf16.mxu0 %v913
    %1090 = vmatmul.mubr.bf16.gmra.mrb[0].mxu0 %v912
    %v1091 = vpop.f32.mrb[0].mxu0
    %v1092 = vadd.f32 %v951, %v1091
    %v1093 = vpop.f32.mrb[0].mxu0
    %v1094 = vpop.f32.mrb[0].mxu0
    %v1095 = vadd.f32 %v951, %v1094
    %v1096 = vpop.f32.mrb[0].mxu0
    %1097 = vdwg.mxu0
    %v1098 = vmax.f32 %v1084, 0.0
    %v1099 = vmax.f32 %v1087, 0.0
    %v1100 = vmax.f32 %v1092, 0.0
    %v1101 = vmax.f32 %v1095, 0.0
    %v1102 = vpack.c.bf16 %v1099, %v1098
    %v1103 = vpack.c.bf16 %v1101, %v1100
    %v1104 = vld [vmem:[#allocation8] sm:$0xf]
    %v1105 = vld [vmem:[#allocation8 + $0x4] sm:$0xf]
    %v1106 = vld [vmem:[#allocation8 + $0x8] sm:$0xf]
    %v1107 = vld [vmem:[#allocation8 + $0xc] sm:$0xf]
    %v1108 = vld [vmem:[#allocation8 + $0x10] sm:$0xf]
    %v1109 = vld [vmem:[#allocation8 + $0x14] sm:$0xf]
    %v1110 = vld [vmem:[#allocation8 + $0x18] sm:$0xf]
    %v1111 = vld [vmem:[#allocation8 + $0x1c] sm:$0xf]
    %v1112 = vld [vmem:[#allocation8 + $0x20] sm:$0xf]
    %v1113 = vld [vmem:[#allocation8 + $0x24] sm:$0xf]
    %v1114 = vld [vmem:[#allocation8 + $0x28] sm:$0xf]
    %v1115 = vld [vmem:[#allocation8 + $0x2c] sm:$0xf]
    %v1116 = vld [vmem:[#allocation8 + $0x30] sm:$0xf]
    %v1117 = vld [vmem:[#allocation8 + $0x34] sm:$0xf]
    %v1118 = vld [vmem:[#allocation8 + $0x38] sm:$0xf]
    %v1119 = vld [vmem:[#allocation8 + $0x3c] sm:$0xf]
    %v1120 = vld [vmem:[%s6] sm:$0x1]
    %v1122 = vlaneseq
    %v1123 = vshrl.u32 %v1122, 7
    %v1124 = vsub.s32 0, %v1123
    %v1125 = vrot.slane %v1120, %v1124
    %v1143 = vunpack.c.l.b16 %v1104
    %v1144 = vunpack.c.l.b16 %v1105
    %v1145 = vunpack.c.l.b16 %v1106
    %v1146 = vunpack.c.l.b16 %v1107
    %v1147 = vunpack.c.l.b16 %v1108
    %v1148 = vunpack.c.l.b16 %v1109
    %v1149 = vunpack.c.l.b16 %v1110
    %v1150 = vunpack.c.l.b16 %v1111
    %v1151 = vunpack.c.l.b16 %v1112
    %v1152 = vunpack.c.l.b16 %v1113
    %v1153 = vunpack.c.l.b16 %v1114
    %v1154 = vunpack.c.l.b16 %v1115
    %v1155 = vunpack.c.l.b16 %v1116
    %v1156 = vunpack.c.l.b16 %v1117
    %v1157 = vunpack.c.l.b16 %v1118
    %v1158 = vunpack.c.l.b16 %v1119
    %v1159 = vpack.c.b16 %v1144, %v1143
    %v1160 = vpack.c.b16 %v1146, %v1145
    %v1161 = vpack.c.b16 %v1148, %v1147
    %v1162 = vpack.c.b16 %v1150, %v1149
    %v1163 = vpack.c.b16 %v1152, %v1151
    %v1164 = vpack.c.b16 %v1154, %v1153
    %v1165 = vpack.c.b16 %v1156, %v1155
    %v1166 = vpack.c.b16 %v1158, %v1157
    %1175 = vmatprep.subr.bf16.mxu0 0
    %1176 = vmatpush1.bf16.msra.mxu0 %v1159
    %1177 = vmatprep.subr.bf16.mxu0 0
    %1178 = vmatpush1.bf16.msra.mxu0 %v1160
    %1179 = vmatprep.subr.bf16.mxu0 0
    %1180 = vmatpush1.bf16.msra.mxu0 %v1161
    %1181 = vmatprep.subr.bf16.mxu0 0
    %1182 = vmatpush1.bf16.msra.mxu0 %v1162
    %1183 = vmatprep.subr.bf16.mxu0 0
    %1184 = vmatpush1.bf16.msra.mxu0 %v1163
    %1185 = vmatprep.subr.bf16.mxu0 0
    %1186 = vmatpush1.bf16.msra.mxu0 %v1164
    %1187 = vmatprep.subr.bf16.mxu0 0
    %1188 = vmatpush1.bf16.msra.mxu0 %v1165
    %1189 = vmatprep.subr.bf16.mxu0 0
    %1190 = vmatpush1.bf16.msra.mxu0 %v1166
    %1191 = vmatprep.subr.bf16.mxu0 0
    %1192 = vmatpush1.bf16.msra.mxu0 0
    %1193 = vmatprep.subr.bf16.mxu0 0
    %1194 = vmatpush1.bf16.msra.mxu0 0
    %1195 = vmatprep.subr.bf16.mxu0 0
    %1196 = vmatpush1.bf16.msra.mxu0 0
    %1197 = vmatprep.subr.bf16.mxu0 0
    %1198 = vmatpush1.bf16.msra.mxu0 0
    %1199 = vmatprep.subr.bf16.mxu0 0
    %1200 = vmatpush1.bf16.msra.mxu0 0
    %1201 = vmatprep.subr.bf16.mxu0 0
    %1202 = vmatpush1.bf16.msra.mxu0 0
    %1203 = vmatprep.subr.bf16.mxu0 0
    %1204 = vmatpush1.bf16.msra.mxu0 0
    %1205 = vmatprep.subr.bf16.mxu0 0
    %1206 = vmatpush1.bf16.msra.mxu0 0
    %1207 = vmatprep.mubr.bf16.mxu0 0
    %1208 = vmatmul.mubr.bf16.gmra.mrb[0].mxu0 %v1102
    %v1209 = vpop.f32.mrb[0].mxu0
    %v1210 = vadd.f32 %v1125, %v1209
    %v1211 = vpop.f32.mrb[0].mxu0
    %v1212 = vpop.f32.mrb[0].mxu0
    %v1213 = vadd.f32 %v1125, %v1212
    %v1214 = vpop.f32.mrb[0].mxu0
    %1215 = vmatprep.mubr.bf16.mxu0 0
    %1216 = vmatmul.mubr.bf16.gmra.mrb[0].mxu0 %v1103
    %v1217 = vpop.f32.mrb[0].mxu0
    %v1218 = vadd.f32 %v1125, %v1217
    %v1219 = vpop.f32.mrb[0].mxu0
    %v1220 = vpop.f32.mrb[0].mxu0
    %v1221 = vadd.f32 %v1125, %v1220
    %v1222 = vpop.f32.mrb[0].mxu0
    %1223 = vdwg.mxu0
    %1224 = vst [vmem:[#allocation10] sm:$0xff] %v1210
    %1225 = vst [vmem:[#allocation10 + $0x8] sm:$0xff] %v1213
    %1226 = vst [vmem:[#allocation10 + $0x10] sm:$0xff] %v1218
    %1227 = vst [vmem:[#allocation10 + $0x18] sm:$0xff] %v1221
    // Predicated region
    $region46: #{tpu_custom_call.1} parent=1 // pred_check
      _
    $region47: #{tpu_custom_call.1} parent=1 // pred_check_branch
      %1229 = sbr.rel (0) target = $region49
    $region48: #{tpu_custom_call.1} parent=1 // pred_region
      %s1231 = ssub.s32 512, 512
      %1232 = vsyncadd [#allocation4], %s1231
      %s1233 = sshll.u32 [#allocation10], 4
      %s1234 = int_to_ptr.vmem [resolvable:$true] %s1233
      %1239 = dma.vmem_to_hbm [thread:$0]  %s1234, 512, %s7, [#allocation4], 128, 128, 8
    $region49: #{tpu_custom_call.1} parent=1 // pred_fallthru
      _
    // Predicated region
    $region50: #{tpu_custom_call.1} parent=1 // pred_check
      _
    $region51: #{tpu_custom_call.1} parent=1 // pred_check_branch
      %1241 = sbr.rel (0) target = $region53
    $region52: #{tpu_custom_call.1} parent=1 // pred_region
      %1242 = dma.done [#allocation4], 512
    $region53: #{tpu_custom_call.1} parent=1 // pred_fallthru
      _
    %1243 = vsyncpa [#allocation3], 1
    %1244 = vsyncpa [#allocation6], 1
    %1245 = vsyncpa [#allocation9], 1
    %1246 = vsyncpa [#allocation4], 1

// kernel: tpu_custom_call.1
$region0: #{tpu_custom_call.1}
  #allocation0 [shape = 'u32[]', space=smem, size = 0x4, offset = 0x4, fixed_abs, tag = 'smem constant byte address 0x4 - core index']
  #allocation1 [shape = 'u32[144,128]{1,0:T(1,128)}', space=vmem, size = 0x12000, scoped, tag = 'internal scratch']
  %s0 = inlined_call_operand.hbm [shape: bf16[32,768], index: 0, kind: input, shape index: {}]
  %s1 = inlined_call_operand.hbm [shape: bf16[768,256], index: 1, kind: input, shape index: {}]
  %s2 = inlined_call_operand.vmem [shape: f32[1,256], index: 2, kind: input, shape index: {}]
  %s3 = inlined_call_operand.hbm [shape: bf16[256,128], index: 3, kind: input, shape index: {}]
  %s4 = inlined_call_operand.vmem [shape: f32[1,128], index: 4, kind: input, shape index: {}]
  %s5 = inlined_call_operand.hbm [shape: bf16[128,128], index: 5, kind: input, shape index: {}]
  %s6 = inlined_call_operand.vmem [shape: f32[1,128], index: 6, kind: input, shape index: {}]
  %s7 = inlined_call_operand.hbm [shape: f32[32,128], index: 7, kind: output, shape index: {}]
  %s8 = sld [smem:[#allocation0]]
  $region54: #{tpu_custom_call.1} parent=0
    _
  %s10 = ssub.s32 1, %s8
  %s11 = scalar_select 0, %s10, %s8
  $region1: #{tpu_custom_call.1} parent=0
    #allocation2 [shape = 'u8[49152]{0}', space=vmem, size = 0xc000, scoped, tag = 'input window, operand 0, single buffered']
    #allocation3 [shape = 's32[1]{0}', space=sflag, size = 0x4, scoped, tag = 'scoped memory for tpu_custom_call.1']
    #allocation4 [shape = 's32[1]{0}', space=sflag, size = 0x4, scoped, tag = 'scoped memory for tpu_custom_call.1']
    #allocation5 [shape = 'u8[393216]{0}', space=vmem, size = 0x60000, scoped, tag = 'input window, operand 1, single buffered']
    #allocation6 [shape = 's32[1]{0}', space=sflag, size = 0x4, scoped, tag = 'scoped memory for tpu_custom_call.1']
    #allocation7 [shape = 'u8[65536]{0}', space=vmem, size = 0x10000, scoped, tag = 'input window, operand 3, single buffered']
    #allocation8 [shape = 'u8[32768]{0}', space=vmem, size = 0x8000, scoped, tag = 'input window, operand 5, single buffered']
    #allocation9 [shape = 's32[1]{0}', space=sflag, size = 0x4, scoped, tag = 'scoped memory for tpu_custom_call.1']
    #allocation10 [shape = 'u8[16384]{0}', space=vmem, size = 0x4000, scoped, tag = 'output window, operand 0, single buffered']
    %12 = vsyncpa [#allocation3], 0
    %13 = vsyncpa [#allocation6], 0
    %14 = vsyncpa [#allocation9], 0
    %15 = vsyncpa [#allocation4], 0
    // Predicated region
    $region2: #{tpu_custom_call.1} parent=1 // pred_check
      _
    $region3: #{tpu_custom_call.1} parent=1 // pred_check_branch
      %17 = sbr.rel (0) target = $region5
    $region4: #{tpu_custom_call.1} parent=1 // pred_region
      %s19 = ssub.s32 1536, 1536
      %20 = vsyncadd [#allocation3], %s19
      %s21 = sshll.u32 [#allocation2], 4
      %s22 = int_to_ptr.vmem [resolvable:$true] %s21
      %27 = dma.hbm_to_vmem [thread:$0]  %s0, 1536, %s22, [#allocation3], 384, 384, 24
    $region5: #{tpu_custom_call.1} parent=1 // pred_fallthru
      _
    // Predicated region
    $region6: #{tpu_custom_call.1} parent=1 // pred_check
      _
    $region7: #{tpu_custom_call.1} parent=1 // pred_check_branch
      %29 = sbr.rel (0) target = $region9
    $region8: #{tpu_custom_call.1} parent=1 // pred_region
      %s31 = ssub.s32 12288, 12288
      %32 = vsyncadd [#allocation6], %s31
      %s33 = sshll.u32 [#allocation5], 4
      %s34 = int_to_ptr.vmem [resolvable:$true] %s33
      %39 = dma.hbm_to_vmem [thread:$0]  %s1, 12288, %s34, [#allocation6], 128, 128, 8
    $region9: #{tpu_custom_call.1} parent=1 // pred_fallthru
      _
    // Predicated region
    $region10: #{tpu_custom_call.1} parent=1 // pred_check
      _
    $region11: #{tpu_custom_call.1} parent=1 // pred_check_branch
      %41 = sbr.rel (0) target = $region13
    $region12: #{tpu_custom_call.1} parent=1 // pred_region
      _
    $region13: #{tpu_custom_call.1} parent=1 // pred_fallthru
      _
    // Predicated region
    $region14: #{tpu_custom_call.1} parent=1 // pred_check
      _
    $region15: #{tpu_custom_call.1} parent=1 // pred_check_branch
      %43 = sbr.rel (0) target = $region17
    $region16: #{tpu_custom_call.1} parent=1 // pred_region
      %s45 = ssub.s32 2048, 2048
      %46 = vsyncadd [#allocation6], %s45
      %s47 = sshll.u32 [#allocation7], 4
      %s48 = int_to_ptr.vmem [resolvable:$true] %s47
      %53 = dma.hbm_to_vmem [thread:$0]  %s3, 2048, %s48, [#allocation6], 64, 64, 4
    $region17: #{tpu_custom_call.1} parent=1 // pred_fallthru
      _
    // Predicated region
    $region18: #{tpu_custom_call.1} parent=1 // pred_check
      _
    $region19: #{tpu_custom_call.1} parent=1 // pred_check_branch
      %55 = sbr.rel (0) target = $region21
    $region20: #{tpu_custom_call.1} parent=1 // pred_region
      _
    $region21: #{tpu_custom_call.1} parent=1 // pred_fallthru
      _
    // Predicated region
    $region22: #{tpu_custom_call.1} parent=1 // pred_check
      _
    $region23: #{tpu_custom_call.1} parent=1 // pred_check_branch
      %57 = sbr.rel (0) target = $region25
    $region24: #{tpu_custom_call.1} parent=1 // pred_region
      %s59 = ssub.s32 1024, 1024
      %60 = vsyncadd [#allocation9], %s59
      %s61 = sshll.u32 [#allocation8], 4
      %s62 = int_to_ptr.vmem [resolvable:$true] %s61
      %67 = dma.hbm_to_vmem [thread:$0]  %s5, 1024, %s62, [#allocation9], 64, 64, 4
    $region25: #{tpu_custom_call.1} parent=1 // pred_fallthru
      _
    // Predicated region
    $region26: #{tpu_custom_call.1} parent=1 // pred_check
      _
    $region27: #{tpu_custom_call.1} parent=1 // pred_check_branch
      %69 = sbr.rel (0) target = $region29
    $region28: #{tpu_custom_call.1} parent=1 // pred_region
      _
    $region29: #{tpu_custom_call.1} parent=1 // pred_fallthru
      _
    // Predicated region
    $region30: #{tpu_custom_call.1} parent=1 // pred_check
      _
    $region31: #{tpu_custom_call.1} parent=1 // pred_check_branch
      %71 = sbr.rel (0) target = $region33
    $region32: #{tpu_custom_call.1} parent=1 // pred_region
      %72 = dma.done [#allocation3], 1536
    $region33: #{tpu_custom_call.1} parent=1 // pred_fallthru
      _
    // Predicated region
    $region34: #{tpu_custom_call.1} parent=1 // pred_check
      _
    $region35: #{tpu_custom_call.1} parent=1 // pred_check_branch
      %74 = sbr.rel (0) target = $region37
    $region36: #{tpu_custom_call.1} parent=1 // pred_region
      %75 = dma.done [#allocation6], 12288
    $region37: #{tpu_custom_call.1} parent=1 // pred_fallthru
      _
    // Predicated region
    $region38: #{tpu_custom_call.1} parent=1 // pred_check
      _
    $region39: #{tpu_custom_call.1} parent=1 // pred_check_branch
      %77 = sbr.rel (0) target = $region41
    $region40: #{tpu_custom_call.1} parent=1 // pred_region
      %78 = dma.done [#allocation6], 2048
    $region41: #{tpu_custom_call.1} parent=1 // pred_fallthru
      _
    // Predicated region
    $region42: #{tpu_custom_call.1} parent=1 // pred_check
      _
    $region43: #{tpu_custom_call.1} parent=1 // pred_check_branch
      %80 = sbr.rel (0) target = $region45
    $region44: #{tpu_custom_call.1} parent=1 // pred_region
      %81 = dma.done [#allocation9], 1024
    $region45: #{tpu_custom_call.1} parent=1 // pred_fallthru
      _
    %v83 = vld [vmem:[#allocation2] sm:$0xff]
    %v84 = vld [vmem:[#allocation2 + $0x8] sm:$0xff]
    %v85 = vld [vmem:[#allocation2 + $0x10] sm:$0xff]
    %v86 = vld [vmem:[#allocation2 + $0x18] sm:$0xff]
    %v87 = vld [vmem:[#allocation2 + $0x20] sm:$0xff]
    %v88 = vld [vmem:[#allocation2 + $0x28] sm:$0xff]
    %v89 = vld [vmem:[#allocation2 + $0x30] sm:$0xff]
    %v90 = vld [vmem:[#allocation2 + $0x38] sm:$0xff]
    %v91 = vld [vmem:[#allocation2 + $0x40] sm:$0xff]
    %v92 = vld [vmem:[#allocation2 + $0x48] sm:$0xff]
    %v93 = vld [vmem:[#allocation2 + $0x50] sm:$0xff]
    %v94 = vld [vmem:[#allocation2 + $0x58] sm:$0xff]
    %v95 = vld [vmem:[#allocation5] sm:$0xff]
    %v96 = vld [vmem:[#allocation5 + $0x8] sm:$0xff]
    %v97 = vld [vmem:[#allocation5 + $0x10] sm:$0xff]
    %v98 = vld [vmem:[#allocation5 + $0x18] sm:$0xff]
    %v99 = vld [vmem:[#allocation5 + $0x20] sm:$0xff]
    %v100 = vld [vmem:[#allocation5 + $0x28] sm:$0xff]
    %v101 = vld [vmem:[#allocation5 + $0x30] sm:$0xff]
    %v102 = vld [vmem:[#allocation5 + $0x38] sm:$0xff]
    %v103 = vld [vmem:[#allocation5 + $0x40] sm:$0xff]
    %v104 = vld [vmem:[#allocation5 + $0x48] sm:$0xff]
    %v105 = vld [vmem:[#allocation5 + $0x50] sm:$0xff]
    %v106 = vld [vmem:[#allocation5 + $0x58] sm:$0xff]
    %v107 = vld [vmem:[#allocation5 + $0x60] sm:$0xff]
    %v108 = vld [vmem:[#allocation5 + $0x68] sm:$0xff]
    %v109 = vld [vmem:[#allocation5 + $0x70] sm:$0xff]
    %v110 = vld [vmem:[#allocation5 + $0x78] sm:$0xff]
    %v111 = vld [vmem:[#allocation5 + $0x80] sm:$0xff]
    %v112 = vld [vmem:[#allocation5 + $0x88] sm:$0xff]
    %v113 = vld [vmem:[#allocation5 + $0x90] sm:$0xff]
    %v114 = vld [vmem:[#allocation5 + $0x98] sm:$0xff]
    %v115 = vld [vmem:[#allocation5 + $0xa0] sm:$0xff]
    %v116 = vld [vmem:[#allocation5 + $0xa8] sm:$0xff]
    %v117 = vld [vmem:[#allocation5 + $0xb0] sm:$0xff]
    %v118 = vld [vmem:[#allocation5 + $0xb8] sm:$0xff]
    %v119 = vld [vmem:[#allocation5 + $0xc0] sm:$0xff]
    %v120 = vld [vmem:[#allocation5 + $0xc8] sm:$0xff]
    %v121 = vld [vmem:[#allocation5 + $0xd0] sm:$0xff]
    %v122 = vld [vmem:[#allocation5 + $0xd8] sm:$0xff]
    %v123 = vld [vmem:[#allocation5 + $0xe0] sm:$0xff]
    %v124 = vld [vmem:[#allocation5 + $0xe8] sm:$0xff]
    %v125 = vld [vmem:[#allocation5 + $0xf0] sm:$0xff]
    %v126 = vld [vmem:[#allocation5 + $0xf8] sm:$0xff]
    %v127 = vld [vmem:[#allocation5 + $0x100] sm:$0xff]
    %v128 = vld [vmem:[#allocation5 + $0x108] sm:$0xff]
    %v129 = vld [vmem:[#allocation5 + $0x110] sm:$0xff]
    %v130 = vld [vmem:[#allocation5 + $0x118] sm:$0xff]
    %v131 = vld [vmem:[#allocation5 + $0x120] sm:$0xff]
    %v132 = vld [vmem:[#allocation5 + $0x128] sm:$0xff]
    %v133 = vld [vmem:[#allocation5 + $0x130] sm:$0xff]
    %v134 = vld [vmem:[#allocation5 + $0x138] sm:$0xff]
    %v135 = vld [vmem:[#allocation5 + $0x140] sm:$0xff]
    %v136 = vld [vmem:[#allocation5 + $0x148] sm:$0xff]
    %v137 = vld [vmem:[#allocation5 + $0x150] sm:$0xff]
    %v138 = vld [vmem:[#allocation5 + $0x158] sm:$0xff]
    %v139 = vld [vmem:[#allocation5 + $0x160] sm:$0xff]
    %v140 = vld [vmem:[#allocation5 + $0x168] sm:$0xff]
    %v141 = vld [vmem:[#allocation5 + $0x170] sm:$0xff]
    %v142 = vld [vmem:[#allocation5 + $0x178] sm:$0xff]
    %v143 = vld [vmem:[#allocation5 + $0x180] sm:$0xff]
    %v144 = vld [vmem:[#allocation5 + $0x188] sm:$0xff]
    %v145 = vld [vmem:[#allocation5 + $0x190] sm:$0xff]
    %v146 = vld [vmem:[#allocation5 + $0x198] sm:$0xff]
    %v147 = vld [vmem:[#allocation5 + $0x1a0] sm:$0xff]
    %v148 = vld [vmem:[#allocation5 + $0x1a8] sm:$0xff]
    %v149 = vld [vmem:[#allocation5 + $0x1b0] sm:$0xff]
    %v150 = vld [vmem:[#allocation5 + $0x1b8] sm:$0xff]
    %v151 = vld [vmem:[#allocation5 + $0x1c0] sm:$0xff]
    %v152 = vld [vmem:[#allocation5 + $0x1c8] sm:$0xff]
    %v153 = vld [vmem:[#allocation5 + $0x1d0] sm:$0xff]
    %v154 = vld [vmem:[#allocation5 + $0x1d8] sm:$0xff]
    %v155 = vld [vmem:[#allocation5 + $0x1e0] sm:$0xff]
    %v156 = vld [vmem:[#allocation5 + $0x1e8] sm:$0xff]
    %v157 = vld [vmem:[#allocation5 + $0x1f0] sm:$0xff]
    %v158 = vld [vmem:[#allocation5 + $0x1f8] sm:$0xff]
    %v159 = vld [vmem:[#allocation5 + $0x200] sm:$0xff]
    %v160 = vld [vmem:[#allocation5 + $0x208] sm:$0xff]
    %v161 = vld [vmem:[#allocation5 + $0x210] sm:$0xff]
    %v162 = vld [vmem:[#allocation5 + $0x218] sm:$0xff]
    %v163 = vld [vmem:[#allocation5 + $0x220] sm:$0xff]
    %v164 = vld [vmem:[#allocation5 + $0x228] sm:$0xff]
    %v165 = vld [vmem:[#allocation5 + $0x230] sm:$0xff]
    %v166 = vld [vmem:[#allocation5 + $0x238] sm:$0xff]
    %v167 = vld [vmem:[#allocation5 + $0x240] sm:$0xff]
    %v168 = vld [vmem:[#allocation5 + $0x248] sm:$0xff]
    %v169 = vld [vmem:[#allocation5 + $0x250] sm:$0xff]
    %v170 = vld [vmem:[#allocation5 + $0x258] sm:$0xff]
    %v171 = vld [vmem:[#allocation5 + $0x260] sm:$0xff]
    %v172 = vld [vmem:[#allocation5 + $0x268] sm:$0xff]
    %v173 = vld [vmem:[#allocation5 + $0x270] sm:$0xff]
    %v174 = vld [vmem:[#allocation5 + $0x278] sm:$0xff]
    %v175 = vld [vmem:[#allocation5 + $0x280] sm:$0xff]
    %v176 = vld [vmem:[#allocation5 + $0x288] sm:$0xff]
    %v177 = vld [vmem:[#allocation5 + $0x290] sm:$0xff]
    %v178 = vld [vmem:[#allocation5 + $0x298] sm:$0xff]
    %v179 = vld [vmem:[#allocation5 + $0x2a0] sm:$0xff]
    %v180 = vld [vmem:[#allocation5 + $0x2a8] sm:$0xff]
    %v181 = vld [vmem:[#allocation5 + $0x2b0] sm:$0xff]
    %v182 = vld [vmem:[#allocation5 + $0x2b8] sm:$0xff]
    %v183 = vld [vmem:[#allocation5 + $0x2c0] sm:$0xff]
    %v184 = vld [vmem:[#allocation5 + $0x2c8] sm:$0xff]
    %v185 = vld [vmem:[#allocation5 + $0x2d0] sm:$0xff]
    %v186 = vld [vmem:[#allocation5 + $0x2d8] sm:$0xff]
    %v187 = vld [vmem:[#allocation5 + $0x2e0] sm:$0xff]
    %v188 = vld [vmem:[#allocation5 + $0x2e8] sm:$0xff]
    %v189 = vld [vmem:[#allocation5 + $0x2f0] sm:$0xff]
    %v190 = vld [vmem:[#allocation5 + $0x2f8] sm:$0xff]
    %v191 = vld [vmem:[%s2] sm:$0x3]
    %v193 = vlaneseq
    %v194 = vshrl.u32 %v193, 7
    %v195 = vsub.s32 0, %v194
    %v196 = vrot.slane %v191, %v195
    %v197 = vlaneseq
    %v198 = vshrl.u32 %v197, 7
    %v199 = vsub.s32 1, %v198
    %v200 = vrot.slane %v191, %v199
    %v215 = vunpack.c.l.b16 %v83
    %v216 = vunpack.c.h.b16 %v83
    %v217 = vunpack.c.l.b16 %v84
    %v218 = vunpack.c.h.b16 %v84
    %v219 = vunpack.c.l.b16 %v85
    %v220 = vunpack.c.h.b16 %v85
    %v221 = vunpack.c.l.b16 %v86
    %v222 = vunpack.c.h.b16 %v86
    %v223 = vunpack.c.l.b16 %v87
    %v224 = vunpack.c.h.b16 %v87
    %v225 = vunpack.c.l.b16 %v88
    %v226 = vunpack.c.h.b16 %v88
    %v227 = vunpack.c.l.b16 %v89
    %v228 = vunpack.c.h.b16 %v89
    %v229 = vunpack.c.l.b16 %v90
    %v230 = vunpack.c.h.b16 %v90
    %v231 = vunpack.c.l.b16 %v91
    %v232 = vunpack.c.h.b16 %v91
    %v233 = vunpack.c.l.b16 %v92
    %v234 = vunpack.c.h.b16 %v92
    %v235 = vunpack.c.l.b16 %v93
    %v236 = vunpack.c.h.b16 %v93
    %v237 = vunpack.c.l.b16 %v94
    %v238 = vunpack.c.h.b16 %v94
    %v239 = vpack.c.b16 %v221, %v215
    %v240 = vpack.c.b16 %v222, %v216
    %v241 = vpack.c.b16 %v223, %v217
    %v242 = vpack.c.b16 %v224, %v218
    %v243 = vpack.c.b16 %v225, %v219
    %v244 = vpack.c.b16 %v226, %v220
    %v245 = vpack.c.b16 %v233, %v227
    %v246 = vpack.c.b16 %v234, %v228
    %v247 = vpack.c.b16 %v235, %v229
    %v248 = vpack.c.b16 %v236, %v230
    %v249 = vpack.c.b16 %v237, %v231
    %v250 = vpack.c.b16 %v238, %v232
    %v359 = vunpack.c.l.b16 %v95
    %v360 = vunpack.c.h.b16 %v95
    %v361 = vunpack.c.l.b16 %v96
    %v362 = vunpack.c.h.b16 %v96
    %v363 = vunpack.c.l.b16 %v97
    %v364 = vunpack.c.h.b16 %v97
    %v365 = vunpack.c.l.b16 %v98
    %v366 = vunpack.c.h.b16 %v98
    %v367 = vunpack.c.l.b16 %v99
    %v368 = vunpack.c.h.b16 %v99
    %v369 = vunpack.c.l.b16 %v100
    %v370 = vunpack.c.h.b16 %v100
    %v371 = vunpack.c.l.b16 %v101
    %v372 = vunpack.c.h.b16 %v101
    %v373 = vunpack.c.l.b16 %v102
    %v374 = vunpack.c.h.b16 %v102
    %v375 = vunpack.c.l.b16 %v103
    %v376 = vunpack.c.h.b16 %v103
    %v377 = vunpack.c.l.b16 %v104
    %v378 = vunpack.c.h.b16 %v104
    %v379 = vunpack.c.l.b16 %v105
    %v380 = vunpack.c.h.b16 %v105
    %v381 = vunpack.c.l.b16 %v106
    %v382 = vunpack.c.h.b16 %v106
    %v383 = vunpack.c.l.b16 %v107
    %v384 = vunpack.c.h.b16 %v107
    %v385 = vunpack.c.l.b16 %v108
    %v386 = vunpack.c.h.b16 %v108
    %v387 = vunpack.c.l.b16 %v109
    %v388 = vunpack.c.h.b16 %v109
    %v389 = vunpack.c.l.b16 %v110
    %v390 = vunpack.c.h.b16 %v110
    %v391 = vunpack.c.l.b16 %v111
    %v392 = vunpack.c.h.b16 %v111
    %v393 = vunpack.c.l.b16 %v112
    %v394 = vunpack.c.h.b16 %v112
    %v395 = vunpack.c.l.b16 %v113
    %v396 = vunpack.c.h.b16 %v113
    %v397 = vunpack.c.l.b16 %v114
    %v398 = vunpack.c.h.b16 %v114
    %v399 = vunpack.c.l.b16 %v115
    %v400 = vunpack.c.h.b16 %v115
    %v401 = vunpack.c.l.b16 %v116
    %v402 = vunpack.c.h.b16 %v116
    %v403 = vunpack.c.l.b16 %v117
    %v404 = vunpack.c.h.b16 %v117
    %v405 = vunpack.c.l.b16 %v118
    %v406 = vunpack.c.h.b16 %v118
    %v407 = vunpack.c.l.b16 %v119
    %v408 = vunpack.c.h.b16 %v119
    %v409 = vunpack.c.l.b16 %v120
    %v410 = vunpack.c.h.b16 %v120
    %v411 = vunpack.c.l.b16 %v121
    %v412 = vunpack.c.h.b16 %v121
    %v413 = vunpack.c.l.b16 %v122
    %v414 = vunpack.c.h.b16 %v122
    %v415 = vunpack.c.l.b16 %v123
    %v416 = vunpack.c.h.b16 %v123
    %v417 = vunpack.c.l.b16 %v124
    %v418 = vunpack.c.h.b16 %v124
    %v419 = vunpack.c.l.b16 %v125
    %v420 = vunpack.c.h.b16 %v125
    %v421 = vunpack.c.l.b16 %v126
    %v422 = vunpack.c.h.b16 %v126
    %v423 = vunpack.c.l.b16 %v127
    %v424 = vunpack.c.h.b16 %v127
    %v425 = vunpack.c.l.b16 %v128
    %v426 = vunpack.c.h.b16 %v128
    %v427 = vunpack.c.l.b16 %v129
    %v428 = vunpack.c.h.b16 %v129
    %v429 = vunpack.c.l.b16 %v130
    %v430 = vunpack.c.h.b16 %v130
    %v431 = vunpack.c.l.b16 %v131
    %v432 = vunpack.c.h.b16 %v131
    %v433 = vunpack.c.l.b16 %v132
    %v434 = vunpack.c.h.b16 %v132
    %v435 = vunpack.c.l.b16 %v133
    %v436 = vunpack.c.h.b16 %v133
    %v437 = vunpack.c.l.b16 %v134
    %v438 = vunpack.c.h.b16 %v134
    %v439 = vunpack.c.l.b16 %v135
    %v440 = vunpack.c.h.b16 %v135
    %v441 = vunpack.c.l.b16 %v136
    %v442 = vunpack.c.h.b16 %v136
    %v443 = vunpack.c.l.b16 %v137
    %v444 = vunpack.c.h.b16 %v137
    %v445 = vunpack.c.l.b16 %v138
    %v446 = vunpack.c.h.b16 %v138
    %v447 = vunpack.c.l.b16 %v139
    %v448 = vunpack.c.h.b16 %v139
    %v449 = vunpack.c.l.b16 %v140
    %v450 = vunpack.c.h.b16 %v140
    %v451 = vunpack.c.l.b16 %v141
    %v452 = vunpack.c.h.b16 %v141
    %v453 = vunpack.c.l.b16 %v142
    %v454 = vunpack.c.h.b16 %v142
    %v455 = vunpack.c.l.b16 %v143
    %v456 = vunpack.c.h.b16 %v143
    %v457 = vunpack.c.l.b16 %v144
    %v458 = vunpack.c.h.b16 %v144
    %v459 = vunpack.c.l.b16 %v145
    %v460 = vunpack.c.h.b16 %v145
    %v461 = vunpack.c.l.b16 %v146
    %v462 = vunpack.c.h.b16 %v146
    %v463 = vunpack.c.l.b16 %v147
    %v464 = vunpack.c.h.b16 %v147
    %v465 = vunpack.c.l.b16 %v148
    %v466 = vunpack.c.h.b16 %v148
    %v467 = vunpack.c.l.b16 %v149
    %v468 = vunpack.c.h.b16 %v149
    %v469 = vunpack.c.l.b16 %v150
    %v470 = vunpack.c.h.b16 %v150
    %v471 = vunpack.c.l.b16 %v151
    %v472 = vunpack.c.h.b16 %v151
    %v473 = vunpack.c.l.b16 %v152
    %v474 = vunpack.c.h.b16 %v152
    %v475 = vunpack.c.l.b16 %v153
    %v476 = vunpack.c.h.b16 %v153
    %v477 = vunpack.c.l.b16 %v154
    %v478 = vunpack.c.h.b16 %v154
    %v479 = vunpack.c.l.b16 %v155
    %v480 = vunpack.c.h.b16 %v155
    %v481 = vunpack.c.l.b16 %v156
    %v482 = vunpack.c.h.b16 %v156
    %v483 = vunpack.c.l.b16 %v157
    %v484 = vunpack.c.h.b16 %v157
    %v485 = vunpack.c.l.b16 %v158
    %v486 = vunpack.c.h.b16 %v158
    %v487 = vunpack.c.l.b16 %v159
    %v488 = vunpack.c.h.b16 %v159
    %v489 = vunpack.c.l.b16 %v160
    %v490 = vunpack.c.h.b16 %v160
    %v491 = vunpack.c.l.b16 %v161
    %v492 = vunpack.c.h.b16 %v161
    %v493 = vunpack.c.l.b16 %v162
    %v494 = vunpack.c.h.b16 %v162
    %v495 = vunpack.c.l.b16 %v163
    %v496 = vunpack.c.h.b16 %v163
    %v497 = vunpack.c.l.b16 %v164
    %v498 = vunpack.c.h.b16 %v164
    %v499 = vunpack.c.l.b16 %v165
    %v500 = vunpack.c.h.b16 %v165
    %v501 = vunpack.c.l.b16 %v166
    %v502 = vunpack.c.h.b16 %v166
    %v503 = vunpack.c.l.b16 %v167
    %v504 = vunpack.c.h.b16 %v167
    %v505 = vunpack.c.l.b16 %v168
    %v506 = vunpack.c.h.b16 %v168
    %v507 = vunpack.c.l.b16 %v169
    %v508 = vunpack.c.h.b16 %v169
    %v509 = vunpack.c.l.b16 %v170
    %v510 = vunpack.c.h.b16 %v170
    %v511 = vunpack.c.l.b16 %v171
    %v512 = vunpack.c.h.b16 %v171
    %v513 = vunpack.c.l.b16 %v172
    %v514 = vunpack.c.h.b16 %v172
    %v515 = vunpack.c.l.b16 %v173
    %v516 = vunpack.c.h.b16 %v173
    %v517 = vunpack.c.l.b16 %v174
    %v518 = vunpack.c.h.b16 %v174
    %v519 = vunpack.c.l.b16 %v175
    %v520 = vunpack.c.h.b16 %v175
    %v521 = vunpack.c.l.b16 %v176
    %v522 = vunpack.c.h.b16 %v176
    %v523 = vunpack.c.l.b16 %v177
    %v524 = vunpack.c.h.b16 %v177
    %v525 = vunpack.c.l.b16 %v178
    %v526 = vunpack.c.h.b16 %v178
    %v527 = vunpack.c.l.b16 %v179
    %v528 = vunpack.c.h.b16 %v179
    %v529 = vunpack.c.l.b16 %v180
    %v530 = vunpack.c.h.b16 %v180
    %v531 = vunpack.c.l.b16 %v181
    %v532 = vunpack.c.h.b16 %v181
    %v533 = vunpack.c.l.b16 %v182
    %v534 = vunpack.c.h.b16 %v182
    %v535 = vunpack.c.l.b16 %v183
    %v536 = vunpack.c.h.b16 %v183
    %v537 = vunpack.c.l.b16 %v184
    %v538 = vunpack.c.h.b16 %v184
    %v539 = vunpack.c.l.b16 %v185
    %v540 = vunpack.c.h.b16 %v185
    %v541 = vunpack.c.l.b16 %v186
    %v542 = vunpack.c.h.b16 %v186
    %v543 = vunpack.c.l.b16 %v187
    %v544 = vunpack.c.h.b16 %v187
    %v545 = vunpack.c.l.b16 %v188
    %v546 = vunpack.c.h.b16 %v188
    %v547 = vunpack.c.l.b16 %v189
    %v548 = vunpack.c.h.b16 %v189
    %v549 = vunpack.c.l.b16 %v190
    %v550 = vunpack.c.h.b16 %v190
    %v551 = vpack.c.b16 %v361, %v359
    %v552 = vpack.c.b16 %v362, %v360
    %v553 = vpack.c.b16 %v365, %v363
    %v554 = vpack.c.b16 %v366, %v364
    %v555 = vpack.c.b16 %v369, %v367
    %v556 = vpack.c.b16 %v370, %v368
    %v557 = vpack.c.b16 %v373, %v371
    %v558 = vpack.c.b16 %v374, %v372
    %v559 = vpack.c.b16 %v377, %v375
    %v560 = vpack.c.b16 %v378, %v376
    %v561 = vpack.c.b16 %v381, %v379
    %v562 = vpack.c.b16 %v382, %v380
    %v563 = vpack.c.b16 %v385, %v383
    %v564 = vpack.c.b16 %v386, %v384
    %v565 = vpack.c.b16 %v389, %v387
    %v566 = vpack.c.b16 %v390, %v388
    %v567 = vpack.c.b16 %v393, %v391
    %v568 = vpack.c.b16 %v394, %v392
    %v569 = vpack.c.b16 %v397, %v395
    %v570 = vpack.c.b16 %v398, %v396
    %v571 = vpack.c.b16 %v401, %v399
    %v572 = vpack.c.b16 %v402, %v400
    %v573 = vpack.c.b16 %v405, %v403
    %v574 = vpack.c.b16 %v406, %v404
    %v575 = vpack.c.b16 %v409, %v407
    %v576 = vpack.c.b16 %v410, %v408
    %v577 = vpack.c.b16 %v413, %v411
    %v578 = vpack.c.b16 %v414, %v412
    %v579 = vpack.c.b16 %v417, %v415
    %v580 = vpack.c.b16 %v418, %v416
    %v581 = vpack.c.b16 %v421, %v419
    %v582 = vpack.c.b16 %v422, %v420
    %v583 = vpack.c.b16 %v425, %v423
    %v584 = vpack.c.b16 %v426, %v424
    %v585 = vpack.c.b16 %v429, %v427
    %v586 = vpack.c.b16 %v430, %v428
    %v587 = vpack.c.b16 %v433, %v431
    %v588 = vpack.c.b16 %v434, %v432
    %v589 = vpack.c.b16 %v437, %v435
    %v590 = vpack.c.b16 %v438, %v436
    %v591 = vpack.c.b16 %v441, %v439
    %v592 = vpack.c.b16 %v442, %v440
    %v593 = vpack.c.b16 %v445, %v443
    %v594 = vpack.c.b16 %v446, %v444
    %v595 = vpack.c.b16 %v449, %v447
    %v596 = vpack.c.b16 %v450, %v448
    %v597 = vpack.c.b16 %v453, %v451
    %v598 = vpack.c.b16 %v454, %v452
    %v599 = vpack.c.b16 %v457, %v455
    %v600 = vpack.c.b16 %v458, %v456
    %v601 = vpack.c.b16 %v461, %v459
    %v602 = vpack.c.b16 %v462, %v460
    %v603 = vpack.c.b16 %v465, %v463
    %v604 = vpack.c.b16 %v466, %v464
    %v605 = vpack.c.b16 %v469, %v467
    %v606 = vpack.c.b16 %v470, %v468
    %v607 = vpack.c.b16 %v473, %v471
    %v608 = vpack.c.b16 %v474, %v472
    %v609 = vpack.c.b16 %v477, %v475
    %v610 = vpack.c.b16 %v478, %v476
    %v611 = vpack.c.b16 %v481, %v479
    %v612 = vpack.c.b16 %v482, %v480
    %v613 = vpack.c.b16 %v485, %v483
    %v614 = vpack.c.b16 %v486, %v484
    %v615 = vpack.c.b16 %v489, %v487
    %v616 = vpack.c.b16 %v490, %v488
    %v617 = vpack.c.b16 %v493, %v491
    %v618 = vpack.c.b16 %v494, %v492
    %v619 = vpack.c.b16 %v497, %v495
    %v620 = vpack.c.b16 %v498, %v496
    %v621 = vpack.c.b16 %v501, %v499
    %v622 = vpack.c.b16 %v502, %v500
    %v623 = vpack.c.b16 %v505, %v503
    %v624 = vpack.c.b16 %v506, %v504
    %v625 = vpack.c.b16 %v509, %v507
    %v626 = vpack.c.b16 %v510, %v508
    %v627 = vpack.c.b16 %v513, %v511
    %v628 = vpack.c.b16 %v514, %v512
    %v629 = vpack.c.b16 %v517, %v515
    %v630 = vpack.c.b16 %v518, %v516
    %v631 = vpack.c.b16 %v521, %v519
    %v632 = vpack.c.b16 %v522, %v520
    %v633 = vpack.c.b16 %v525, %v523
    %v634 = vpack.c.b16 %v526, %v524
    %v635 = vpack.c.b16 %v529, %v527
    %v636 = vpack.c.b16 %v530, %v528
    %v637 = vpack.c.b16 %v533, %v531
    %v638 = vpack.c.b16 %v534, %v532
    %v639 = vpack.c.b16 %v537, %v535
    %v640 = vpack.c.b16 %v538, %v536
    %v641 = vpack.c.b16 %v541, %v539
    %v642 = vpack.c.b16 %v542, %v540
    %v643 = vpack.c.b16 %v545, %v543
    %v644 = vpack.c.b16 %v546, %v544
    %v645 = vpack.c.b16 %v549, %v547
    %v646 = vpack.c.b16 %v550, %v548
    %743 = vmatprep.subr.bf16.mxu0 %v552
    %744 = vmatpush1.bf16.msra.mxu0 %v551
    %745 = vmatprep.subr.bf16.mxu0 %v554
    %746 = vmatpush1.bf16.msra.mxu0 %v553
    %747 = vmatprep.subr.bf16.mxu0 %v556
    %748 = vmatpush1.bf16.msra.mxu0 %v555
    %749 = vmatprep.subr.bf16.mxu0 %v558
    %750 = vmatpush1.bf16.msra.mxu0 %v557
    %751 = vmatprep.subr.bf16.mxu0 %v560
    %752 = vmatpush1.bf16.msra.mxu0 %v559
    %753 = vmatprep.subr.bf16.mxu0 %v562
    %754 = vmatpush1.bf16.msra.mxu0 %v561
    %755 = vmatprep.subr.bf16.mxu0 %v564
    %756 = vmatpush1.bf16.msra.mxu0 %v563
    %757 = vmatprep.subr.bf16.mxu0 %v566
    %758 = vmatpush1.bf16.msra.mxu0 %v565
    %759 = vmatprep.subr.bf16.mxu0 %v568
    %760 = vmatpush1.bf16.msra.mxu0 %v567
    %761 = vmatprep.subr.bf16.mxu0 %v570
    %762 = vmatpush1.bf16.msra.mxu0 %v569
    %763 = vmatprep.subr.bf16.mxu0 %v572
    %764 = vmatpush1.bf16.msra.mxu0 %v571
    %765 = vmatprep.subr.bf16.mxu0 %v574
    %766 = vmatpush1.bf16.msra.mxu0 %v573
    %767 = vmatprep.subr.bf16.mxu0 %v576
    %768 = vmatpush1.bf16.msra.mxu0 %v575
    %769 = vmatprep.subr.bf16.mxu0 %v578
    %770 = vmatpush1.bf16.msra.mxu0 %v577
    %771 = vmatprep.subr.bf16.mxu0 %v580
    %772 = vmatpush1.bf16.msra.mxu0 %v579
    %773 = vmatprep.subr.bf16.mxu0 %v582
    %774 = vmatpush1.bf16.msra.mxu0 %v581
    %775 = vmatprep.mubr.bf16.mxu0 %v240
    %776 = vmatmul.mubr.bf16.gmra.mrb[0].mxu0 %v239
    %v777 = vpop.f32.mrb[0].mxu0
    %v778 = vadd.f32 %v196, %v777
    %v779 = vpop.f32.mrb[0].mxu0
    %v780 = vadd.f32 %v200, %v779
    %v781 = vpop.f32.mrb[0].mxu0
    %v782 = vadd.f32 %v196, %v781
    %v783 = vpop.f32.mrb[0].mxu0
    %v784 = vadd.f32 %v200, %v783
    %785 = vmatprep.mubr.bf16.mxu0 %v246
    %786 = vmatmul.mubr.bf16.gmra.mrb[0].mxu0 %v245
    %v787 = vpop.f32.mrb[0].mxu0
    %v788 = vadd.f32 %v196, %v787
    %v789 = vpop.f32.mrb[0].mxu0
    %v790 = vadd.f32 %v200, %v789
    %v791 = vpop.f32.mrb[0].mxu0
    %v792 = vadd.f32 %v196, %v791
    %v793 = vpop.f32.mrb[0].mxu0
    %v794 = vadd.f32 %v200, %v793
    %795 = vdwg.mxu0
    %796 = vmatprep.subr.bf16.mxu0 %v584
    %797 = vmatpush1.bf16.msra.mxu0 %v583
    %798 = vmatprep.subr.bf16.mxu0 %v586
    %799 = vmatpush1.bf16.msra.mxu0 %v585
    %800 = vmatprep.subr.bf16.mxu0 %v588
    %801 = vmatpush1.bf16.msra.mxu0 %v587
    %802 = vmatprep.subr.bf16.mxu0 %v590
    %803 = vmatpush1.bf16.msra.mxu0 %v589
    %804 = vmatprep.subr.bf16.mxu0 %v592
    %805 = vmatpush1.bf16.msra.mxu0 %v591
    %806 = vmatprep.subr.bf16.mxu0 %v594
    %807 = vmatpush1.bf16.msra.mxu0 %v593
    %808 = vmatprep.subr.bf16.mxu0 %v596
    %809 = vmatpush1.bf16.msra.mxu0 %v595
    %810 = vmatprep.subr.bf16.mxu0 %v598
    %811 = vmatpush1.bf16.msra.mxu0 %v597
    %812 = vmatprep.subr.bf16.mxu0 %v600
    %813 = vmatpush1.bf16.msra.mxu0 %v599
    %814 = vmatprep.subr.bf16.mxu0 %v602
    %815 = vmatpush1.bf16.msra.mxu0 %v601
    %816 = vmatprep.subr.bf16.mxu0 %v604
    %817 = vmatpush1.bf16.msra.mxu0 %v603
    %818 = vmatprep.subr.bf16.mxu0 %v606
    %819 = vmatpush1.bf16.msra.mxu0 %v605
    %820 = vmatprep.subr.bf16.mxu0 %v608
    %821 = vmatpush1.bf16.msra.mxu0 %v607
    %822 = vmatprep.subr.bf16.mxu0 %v610
    %823 = vmatpush1.bf16.msra.mxu0 %v609
    %824 = vmatprep.subr.bf16.mxu0 %v612
    %825 = vmatpush1.bf16.msra.mxu0 %v611
    %826 = vmatprep.subr.bf16.mxu0 %v614
    %827 = vmatpush1.bf16.msra.mxu0 %v613
    %828 = vmatprep.mubr.bf16.mxu0 %v242
    %829 = vmatmul.mubr.bf16.gmra.mrb[0].mxu0 %v241
    %v830 = vpop.f32.mrb[0].mxu0
    %v831 = vadd.f32 %v778, %v830
    %v832 = vpop.f32.mrb[0].mxu0
    %v833 = vadd.f32 %v780, %v832
    %v834 = vpop.f32.mrb[0].mxu0
    %v835 = vadd.f32 %v782, %v834
    %v836 = vpop.f32.mrb[0].mxu0
    %v837 = vadd.f32 %v784, %v836
    %838 = vmatprep.mubr.bf16.mxu0 %v248
    %839 = vmatmul.mubr.bf16.gmra.mrb[0].mxu0 %v247
    %v840 = vpop.f32.mrb[0].mxu0
    %v841 = vadd.f32 %v788, %v840
    %v842 = vpop.f32.mrb[0].mxu0
    %v843 = vadd.f32 %v790, %v842
    %v844 = vpop.f32.mrb[0].mxu0
    %v845 = vadd.f32 %v792, %v844
    %v846 = vpop.f32.mrb[0].mxu0
    %v847 = vadd.f32 %v794, %v846
    %848 = vdwg.mxu0
    %849 = vmatprep.subr.bf16.mxu0 %v616
    %850 = vmatpush1.bf16.msra.mxu0 %v615
    %851 = vmatprep.subr.bf16.mxu0 %v618
    %852 = vmatpush1.bf16.msra.mxu0 %v617
    %853 = vmatprep.subr.bf16.mxu0 %v620
    %854 = vmatpush1.bf16.msra.mxu0 %v619
    %855 = vmatprep.subr.bf16.mxu0 %v622
    %856 = vmatpush1.bf16.msra.mxu0 %v621
    %857 = vmatprep.subr.bf16.mxu0 %v624
    %858 = vmatpush1.bf16.msra.mxu0 %v623
    %859 = vmatprep.subr.bf16.mxu0 %v626
    %860 = vmatpush1.bf16.msra.mxu0 %v625
    %861 = vmatprep.subr.bf16.mxu0 %v628
    %862 = vmatpush1.bf16.msra.mxu0 %v627
    %863 = vmatprep.subr.bf16.mxu0 %v630
    %864 = vmatpush1.bf16.msra.mxu0 %v629
    %865 = vmatprep.subr.bf16.mxu0 %v632
    %866 = vmatpush1.bf16.msra.mxu0 %v631
    %867 = vmatprep.subr.bf16.mxu0 %v634
    %868 = vmatpush1.bf16.msra.mxu0 %v633
    %869 = vmatprep.subr.bf16.mxu0 %v636
    %870 = vmatpush1.bf16.msra.mxu0 %v635
    %871 = vmatprep.subr.bf16.mxu0 %v638
    %872 = vmatpush1.bf16.msra.mxu0 %v637
    %873 = vmatprep.subr.bf16.mxu0 %v640
    %874 = vmatpush1.bf16.msra.mxu0 %v639
    %875 = vmatprep.subr.bf16.mxu0 %v642
    %876 = vmatpush1.bf16.msra.mxu0 %v641
    %877 = vmatprep.subr.bf16.mxu0 %v644
    %878 = vmatpush1.bf16.msra.mxu0 %v643
    %879 = vmatprep.subr.bf16.mxu0 %v646
    %880 = vmatpush1.bf16.msra.mxu0 %v645
    %881 = vmatprep.mubr.bf16.mxu0 %v244
    %882 = vmatmul.mubr.bf16.gmra.mrb[0].mxu0 %v243
    %v883 = vpop.f32.mrb[0].mxu0
    %v884 = vadd.f32 %v831, %v883
    %v885 = vpop.f32.mrb[0].mxu0
    %v886 = vadd.f32 %v833, %v885
    %v887 = vpop.f32.mrb[0].mxu0
    %v888 = vadd.f32 %v835, %v887
    %v889 = vpop.f32.mrb[0].mxu0
    %v890 = vadd.f32 %v837, %v889
    %891 = vmatprep.mubr.bf16.mxu0 %v250
    %892 = vmatmul.mubr.bf16.gmra.mrb[0].mxu0 %v249
    %v893 = vpop.f32.mrb[0].mxu0
    %v894 = vadd.f32 %v841, %v893
    %v895 = vpop.f32.mrb[0].mxu0
    %v896 = vadd.f32 %v843, %v895
    %v897 = vpop.f32.mrb[0].mxu0
    %v898 = vadd.f32 %v845, %v897
    %v899 = vpop.f32.mrb[0].mxu0
    %v900 = vadd.f32 %v847, %v899
    %901 = vdwg.mxu0
    %v902 = vmax.f32 %v884, 0.0
    %v903 = vmax.f32 %v886, 0.0
    %v904 = vmax.f32 %v888, 0.0
    %v905 = vmax.f32 %v890, 0.0
    %v906 = vmax.f32 %v894, 0.0
    %v907 = vmax.f32 %v896, 0.0
    %v908 = vmax.f32 %v898, 0.0
    %v909 = vmax.f32 %v900, 0.0
    %v910 = vpack.c.bf16 %v904, %v902
    %v911 = vpack.c.bf16 %v905, %v903
    %v912 = vpack.c.bf16 %v908, %v906
    %v913 = vpack.c.bf16 %v909, %v907
    %v914 = vld [vmem:[#allocation7] sm:$0xf]
    %v915 = vld [vmem:[#allocation7 + $0x4] sm:$0xf]
    %v916 = vld [vmem:[#allocation7 + $0x8] sm:$0xf]
    %v917 = vld [vmem:[#allocation7 + $0xc] sm:$0xf]
    %v918 = vld [vmem:[#allocation7 + $0x10] sm:$0xf]
    %v919 = vld [vmem:[#allocation7 + $0x14] sm:$0xf]
    %v920 = vld [vmem:[#allocation7 + $0x18] sm:$0xf]
    %v921 = vld [vmem:[#allocation7 + $0x1c] sm:$0xf]
    %v922 = vld [vmem:[#allocation7 + $0x20] sm:$0xf]
    %v923 = vld [vmem:[#allocation7 + $0x24] sm:$0xf]
    %v924 = vld [vmem:[#allocation7 + $0x28] sm:$0xf]
    %v925 = vld [vmem:[#allocation7 + $0x2c] sm:$0xf]
    %v926 = vld [vmem:[#allocation7 + $0x30] sm:$0xf]
    %v927 = vld [vmem:[#allocation7 + $0x34] sm:$0xf]
    %v928 = vld [vmem:[#allocation7 + $0x38] sm:$0xf]
    %v929 = vld [vmem:[#allocation7 + $0x3c] sm:$0xf]
    %v930 = vld [vmem:[#allocation7 + $0x40] sm:$0xf]
    %v931 = vld [vmem:[#allocation7 + $0x44] sm:$0xf]
    %v932 = vld [vmem:[#allocation7 + $0x48] sm:$0xf]
    %v933 = vld [vmem:[#allocation7 + $0x4c] sm:$0xf]
    %v934 = vld [vmem:[#allocation7 + $0x50] sm:$0xf]
    %v935 = vld [vmem:[#allocation7 + $0x54] sm:$0xf]
    %v936 = vld [vmem:[#allocation7 + $0x58] sm:$0xf]
    %v937 = vld [vmem:[#allocation7 + $0x5c] sm:$0xf]
    %v938 = vld [vmem:[#allocation7 + $0x60] sm:$0xf]
    %v939 = vld [vmem:[#allocation7 + $0x64] sm:$0xf]
    %v940 = vld [vmem:[#allocation7 + $0x68] sm:$0xf]
    %v941 = vld [vmem:[#allocation7 + $0x6c] sm:$0xf]
    %v942 = vld [vmem:[#allocation7 + $0x70] sm:$0xf]
    %v943 = vld [vmem:[#allocation7 + $0x74] sm:$0xf]
    %v944 = vld [vmem:[#allocation7 + $0x78] sm:$0xf]
    %v945 = vld [vmem:[#allocation7 + $0x7c] sm:$0xf]
    %v946 = vld [vmem:[%s4] sm:$0x1]
    %v948 = vlaneseq
    %v949 = vshrl.u32 %v948, 7
    %v950 = vsub.s32 0, %v949
    %v951 = vrot.slane %v946, %v950
    %v985 = vunpack.c.l.b16 %v914
    %v986 = vunpack.c.l.b16 %v915
    %v987 = vunpack.c.l.b16 %v916
    %v988 = vunpack.c.l.b16 %v917
    %v989 = vunpack.c.l.b16 %v918
    %v990 = vunpack.c.l.b16 %v919
    %v991 = vunpack.c.l.b16 %v920
    %v992 = vunpack.c.l.b16 %v921
    %v993 = vunpack.c.l.b16 %v922
    %v994 = vunpack.c.l.b16 %v923
    %v995 = vunpack.c.l.b16 %v924
    %v996 = vunpack.c.l.b16 %v925
    %v997 = vunpack.c.l.b16 %v926
    %v998 = vunpack.c.l.b16 %v927
    %v999 = vunpack.c.l.b16 %v928
    %v1000 = vunpack.c.l.b16 %v929
    %v1001 = vunpack.c.l.b16 %v930
    %v1002 = vunpack.c.l.b16 %v931
    %v1003 = vunpack.c.l.b16 %v932
    %v1004 = vunpack.c.l.b16 %v933
    %v1005 = vunpack.c.l.b16 %v934
    %v1006 = vunpack.c.l.b16 %v935
    %v1007 = vunpack.c.l.b16 %v936
    %v1008 = vunpack.c.l.b16 %v937
    %v1009 = vunpack.c.l.b16 %v938
    %v1010 = vunpack.c.l.b16 %v939
    %v1011 = vunpack.c.l.b16 %v940
    %v1012 = vunpack.c.l.b16 %v941
    %v1013 = vunpack.c.l.b16 %v942
    %v1014 = vunpack.c.l.b16 %v943
    %v1015 = vunpack.c.l.b16 %v944
    %v1016 = vunpack.c.l.b16 %v945
    %v1017 = vpack.c.b16 %v986, %v985
    %v1018 = vpack.c.b16 %v988, %v987
    %v1019 = vpack.c.b16 %v990, %v989
    %v1020 = vpack.c.b16 %v992, %v991
    %v1021 = vpack.c.b16 %v994, %v993
    %v1022 = vpack.c.b16 %v996, %v995
    %v1023 = vpack.c.b16 %v998, %v997
    %v1024 = vpack.c.b16 %v1000, %v999
    %v1025 = vpack.c.b16 %v1002, %v1001
    %v1026 = vpack.c.b16 %v1004, %v1003
    %v1027 = vpack.c.b16 %v1006, %v1005
    %v1028 = vpack.c.b16 %v1008, %v1007
    %v1029 = vpack.c.b16 %v1010, %v1009
    %v1030 = vpack.c.b16 %v1012, %v1011
    %v1031 = vpack.c.b16 %v1014, %v1013
    %v1032 = vpack.c.b16 %v1016, %v1015
    %1049 = vmatprep.subr.bf16.mxu0 0
    %1050 = vmatpush1.bf16.msra.mxu0 %v1017
    %1051 = vmatprep.subr.bf16.mxu0 0
    %1052 = vmatpush1.bf16.msra.mxu0 %v1018
    %1053 = vmatprep.subr.bf16.mxu0 0
    %1054 = vmatpush1.bf16.msra.mxu0 %v1019
    %1055 = vmatprep.subr.bf16.mxu0 0
    %1056 = vmatpush1.bf16.msra.mxu0 %v1020
    %1057 = vmatprep.subr.bf16.mxu0 0
    %1058 = vmatpush1.bf16.msra.mxu0 %v1021
    %1059 = vmatprep.subr.bf16.mxu0 0
    %1060 = vmatpush1.bf16.msra.mxu0 %v1022
    %1061 = vmatprep.subr.bf16.mxu0 0
    %1062 = vmatpush1.bf16.msra.mxu0 %v1023
    %1063 = vmatprep.subr.bf16.mxu0 0
    %1064 = vmatpush1.bf16.msra.mxu0 %v1024
    %1065 = vmatprep.subr.bf16.mxu0 0
    %1066 = vmatpush1.bf16.msra.mxu0 %v1025
    %1067 = vmatprep.subr.bf16.mxu0 0
    %1068 = vmatpush1.bf16.msra.mxu0 %v1026
    %1069 = vmatprep.subr.bf16.mxu0 0
    %1070 = vmatpush1.bf16.msra.mxu0 %v1027
    %1071 = vmatprep.subr.bf16.mxu0 0
    %1072 = vmatpush1.bf16.msra.mxu0 %v1028
    %1073 = vmatprep.subr.bf16.mxu0 0
    %1074 = vmatpush1.bf16.msra.mxu0 %v1029
    %1075 = vmatprep.subr.bf16.mxu0 0
    %1076 = vmatpush1.bf16.msra.mxu0 %v1030
    %1077 = vmatprep.subr.bf16.mxu0 0
    %1078 = vmatpush1.bf16.msra.mxu0 %v1031
    %1079 = vmatprep.subr.bf16.mxu0 0
    %1080 = vmatpush1.bf16.msra.mxu0 %v1032
    %1081 = vmatprep.mubr.bf16.mxu0 %v911
    %1082 = vmatmul.mubr.bf16.gmra.mrb[0].mxu0 %v910
    %v1083 = vpop.f32.mrb[0].mxu0
    %v1084 = vadd.f32 %v951, %v1083
    %v1085 = vpop.f32.mrb[0].mxu0
    %v1086 = vpop.f32.mrb[0].mxu0
    %v1087 = vadd.f32 %v951, %v1086
    %v1088 = vpop.f32.mrb[0].mxu0
    %1089 = vmatprep.mubr.bf16.mxu0 %v913
    %1090 = vmatmul.mubr.bf16.gmra.mrb[0].mxu0 %v912
    %v1091 = vpop.f32.mrb[0].mxu0
    %v1092 = vadd.f32 %v951, %v1091
    %v1093 = vpop.f32.mrb[0].mxu0
    %v1094 = vpop.f32.mrb[0].mxu0
    %v1095 = vadd.f32 %v951, %v1094
    %v1096 = vpop.f32.mrb[0].mxu0
    %1097 = vdwg.mxu0
    %v1098 = vmax.f32 %v1084, 0.0
    %v1099 = vmax.f32 %v1087, 0.0
    %v1100 = vmax.f32 %v1092, 0.0
    %v1101 = vmax.f32 %v1095, 0.0
    %v1102 = vpack.c.bf16 %v1099, %v1098
    %v1103 = vpack.c.bf16 %v1101, %v1100
    %v1104 = vld [vmem:[#allocation8] sm:$0xf]
    %v1105 = vld [vmem:[#allocation8 + $0x4] sm:$0xf]
    %v1106 = vld [vmem:[#allocation8 + $0x8] sm:$0xf]
    %v1107 = vld [vmem:[#allocation8 + $0xc] sm:$0xf]
    %v1108 = vld [vmem:[#allocation8 + $0x10] sm:$0xf]
    %v1109 = vld [vmem:[#allocation8 + $0x14] sm:$0xf]
    %v1110 = vld [vmem:[#allocation8 + $0x18] sm:$0xf]
    %v1111 = vld [vmem:[#allocation8 + $0x1c] sm:$0xf]
    %v1112 = vld [vmem:[#allocation8 + $0x20] sm:$0xf]
    %v1113 = vld [vmem:[#allocation8 + $0x24] sm:$0xf]
    %v1114 = vld [vmem:[#allocation8 + $0x28] sm:$0xf]
    %v1115 = vld [vmem:[#allocation8 + $0x2c] sm:$0xf]
    %v1116 = vld [vmem:[#allocation8 + $0x30] sm:$0xf]
    %v1117 = vld [vmem:[#allocation8 + $0x34] sm:$0xf]
    %v1118 = vld [vmem:[#allocation8 + $0x38] sm:$0xf]
    %v1119 = vld [vmem:[#allocation8 + $0x3c] sm:$0xf]
    %v1120 = vld [vmem:[%s6] sm:$0x1]
    %v1122 = vlaneseq
    %v1123 = vshrl.u32 %v1122, 7
    %v1124 = vsub.s32 0, %v1123
    %v1125 = vrot.slane %v1120, %v1124
    %v1143 = vunpack.c.l.b16 %v1104
    %v1144 = vunpack.c.l.b16 %v1105
    %v1145 = vunpack.c.l.b16 %v1106
    %v1146 = vunpack.c.l.b16 %v1107
    %v1147 = vunpack.c.l.b16 %v1108
    %v1148 = vunpack.c.l.b16 %v1109
    %v1149 = vunpack.c.l.b16 %v1110
    %v1150 = vunpack.c.l.b16 %v1111
    %v1151 = vunpack.c.l.b16 %v1112
    %v1152 = vunpack.c.l.b16 %v1113
    %v1153 = vunpack.c.l.b16 %v1114
    %v1154 = vunpack.c.l.b16 %v1115
    %v1155 = vunpack.c.l.b16 %v1116
    %v1156 = vunpack.c.l.b16 %v1117
    %v1157 = vunpack.c.l.b16 %v1118
    %v1158 = vunpack.c.l.b16 %v1119
    %v1159 = vpack.c.b16 %v1144, %v1143
    %v1160 = vpack.c.b16 %v1146, %v1145
    %v1161 = vpack.c.b16 %v1148, %v1147
    %v1162 = vpack.c.b16 %v1150, %v1149
    %v1163 = vpack.c.b16 %v1152, %v1151
    %v1164 = vpack.c.b16 %v1154, %v1153
    %v1165 = vpack.c.b16 %v1156, %v1155
    %v1166 = vpack.c.b16 %v1158, %v1157
    %1175 = vmatprep.subr.bf16.mxu0 0
    %1176 = vmatpush1.bf16.msra.mxu0 %v1159
    %1177 = vmatprep.subr.bf16.mxu0 0
    %1178 = vmatpush1.bf16.msra.mxu0 %v1160
    %1179 = vmatprep.subr.bf16.mxu0 0
    %1180 = vmatpush1.bf16.msra.mxu0 %v1161
    %1181 = vmatprep.subr.bf16.mxu0 0
    %1182 = vmatpush1.bf16.msra.mxu0 %v1162
    %1183 = vmatprep.subr.bf16.mxu0 0
    %1184 = vmatpush1.bf16.msra.mxu0 %v1163
    %1185 = vmatprep.subr.bf16.mxu0 0
    %1186 = vmatpush1.bf16.msra.mxu0 %v1164
    %1187 = vmatprep.subr.bf16.mxu0 0
    %1188 = vmatpush1.bf16.msra.mxu0 %v1165
    %1189 = vmatprep.subr.bf16.mxu0 0
    %1190 = vmatpush1.bf16.msra.mxu0 %v1166
    %1191 = vmatprep.subr.bf16.mxu0 0
    %1192 = vmatpush1.bf16.msra.mxu0 0
    %1193 = vmatprep.subr.bf16.mxu0 0
    %1194 = vmatpush1.bf16.msra.mxu0 0
    %1195 = vmatprep.subr.bf16.mxu0 0
    %1196 = vmatpush1.bf16.msra.mxu0 0
    %1197 = vmatprep.subr.bf16.mxu0 0
    %1198 = vmatpush1.bf16.msra.mxu0 0
    %1199 = vmatprep.subr.bf16.mxu0 0
    %1200 = vmatpush1.bf16.msra.mxu0 0
    %1201 = vmatprep.subr.bf16.mxu0 0
    %1202 = vmatpush1.bf16.msra.mxu0 0
    %1203 = vmatprep.subr.bf16.mxu0 0
    %1204 = vmatpush1.bf16.msra.mxu0 0
    %1205 = vmatprep.subr.bf16.mxu0 0
    %1206 = vmatpush1.bf16.msra.mxu0 0
    %1207 = vmatprep.mubr.bf16.mxu0 0
    %1208 = vmatmul.mubr.bf16.gmra.mrb[0].mxu0 %v1102
    %v1209 = vpop.f32.mrb[0].mxu0
    %v1210 = vadd.f32 %v1125, %v1209
    %v1211 = vpop.f32.mrb[0].mxu0
    %v1212 = vpop.f32.mrb[0].mxu0
    %v1213 = vadd.f32 %v1125, %v1212
    %v1214 = vpop.f32.mrb[0].mxu0
    %1215 = vmatprep.mubr.bf16.mxu0 0
    %1216 = vmatmul.mubr.bf16.gmra.mrb[0].mxu0 %v1103
    %v1217 = vpop.f32.mrb[0].mxu0
    %v1218 = vadd.f32 %v1125, %v1217
    %v1219 = vpop.f32.mrb[0].mxu0
    %v1220 = vpop.f32.mrb[0].mxu0
    %v1221 = vadd.f32 %v1125, %v1220
    %v1222 = vpop.f32.mrb[0].mxu0
    %1223 = vdwg.mxu0
    %1224 = vst [vmem:[#allocation10] sm:$0xff] %v1210
    %1225 = vst [vmem:[#allocation10 + $0x8] sm:$0xff] %v1213
    %1226 = vst [vmem:[#allocation10 + $0x10] sm:$0xff] %v1218
    %1227 = vst [vmem:[#allocation10 + $0x18] sm:$0xff] %v1221
    // Predicated region
    $region46: #{tpu_custom_call.1} parent=1 // pred_check
      _
    $region47: #{tpu_custom_call.1} parent=1 // pred_check_branch
      %1229 = sbr.rel (0) target = $region49
    $region48: #{tpu_custom_call.1} parent=1 // pred_region
      %s1231 = ssub.s32 512, 512
      %1232 = vsyncadd [#allocation4], %s1231
      %s1233 = sshll.u32 [#allocation10], 4
      %s1234 = int_to_ptr.vmem [resolvable:$true] %s1233
      %1239 = dma.vmem_to_hbm [thread:$0]  %s1234, 512, %s7, [#allocation4], 128, 128, 8
    $region49: #{tpu_custom_call.1} parent=1 // pred_fallthru
      _
    // Predicated region
    $region50: #{tpu_custom_call.1} parent=1 // pred_check
      _
    $region51: #{tpu_custom_call.1} parent=1 // pred_check_branch
      %1241 = sbr.rel (0) target = $region53
    $region52: #{tpu_custom_call.1} parent=1 // pred_region
      %1242 = dma.done [#allocation4], 512
    $region53: #{tpu_custom_call.1} parent=1 // pred_fallthru
      _
    %1243 = vsyncpa [#allocation3], 1
    %1244 = vsyncpa [#allocation6], 1
    %1245 = vsyncpa [#allocation9], 1
    %1246 = vsyncpa [#allocation4], 1

</llo_original>
